<compile_context>
chip_gen: v7x
topology: tpu7x:2x2x1
jax: 0.10.0
libtpu: 0.0.40
codegen_flags: <defaults>
</compile_context>

<pallas_src>
import jax
import jax.numpy as jnp
from jax.experimental import pallas as pl
from jax.experimental.pallas import tpu as pltpu

# ---------------------------------------------------------------------------
# Network layer sizes (from Distiller.__init__)
# ---------------------------------------------------------------------------
DIMS = [536, 256, 128, 64, 128, 256, 256, 536]    # logical (PyTorch) dims, lin_1..lin_7
PDIMS = [640, 256, 128, 128, 128, 256, 256, 536]  # lane-padded compute dims (128 multiples)
N_LAYERS = 7                                      # 7 Linear layers, first 6 have BN+ReLU
N_BN = N_LAYERS - 1
GB_WIDTH = 256                                    # widest BN'd feature dim (pack width)
BN_EPS = 1e-5
OUT_DIM = DIMS[-1]


# ---------------------------------------------------------------------------
# Kernel: whole forward in one grid-less invocation (everything fits in VMEM)
#   args: x (bf16, padded to 640), w1..w7 (bf16, pre-transposed, zero-padded),
#         gb (12,256 f32: packed [gamma;beta] rows), b7 (1,536 f32), out (f32)
# ---------------------------------------------------------------------------
def distiller_kernel(x_ref, w1, w2, w3, w4, w5, w6, w7, gb_ref, b7_ref, out_ref):
    w_refs = (w1, w2, w3, w4, w5, w6, w7)
    gb = gb_ref[...]                       # (2*N_BN, GB_WIDTH) f32, loaded once

    h = x_ref[...]                         # (B, 640) bf16 — straight onto the MXU
    for layer in range(N_LAYERS):
        # Linear on the MXU: bf16 x bf16 -> f32 accumulation.
        h = jnp.dot(h, w_refs[layer][...], preferred_element_type=jnp.float32)
        if layer < N_BN:
            f = PDIMS[layer + 1]
            gamma = gb[2 * layer: 2 * layer + 1, :f]        # (1, f)
            beta = gb[2 * layer + 1: 2 * layer + 2, :f]     # (1, f)
            # One-pass batch statistics (biased 1/N variance, training-mode BN).
            # Note: the Linear bias is omitted — it is exactly cancelled by the
            # batch-mean subtraction.  Padded features have gamma=beta=0 and thus
            # come out exactly 0 (then hit zero weight rows of the next layer).
            mean = jnp.mean(h, axis=0, keepdims=True)
            msq = jnp.mean(h * h, axis=0, keepdims=True)
            var = msq - mean * mean
            scale = gamma * jax.lax.rsqrt(var + BN_EPS)     # (1, f)
            shift = beta - mean * scale                     # mean folded into shift
            # Fused normalize + affine + ReLU; Dropout(0.05) is identity here.
            h = jnp.maximum(h * scale + shift, 0.0).astype(jnp.bfloat16)
        else:
            # Final Linear keeps its bias (no BN after it); store directly.
            out_ref[...] = (h + b7_ref[...]).astype(out_ref.dtype)


def _vmem_limit_bytes():
    # Explicit scoped-VMEM budget: ~7/8 of physical, capped at 100 MiB
    # -> 56 MiB on v7x (64 MiB physical), 100 MiB on v5e/v6e (128 MiB physical).
    try:
        cap = int(pltpu.get_tpu_info().vmem_capacity_bytes)
        return min(cap * 7 // 8, 100 << 20)
    except Exception:
        return 56 << 20    # safe fallback on every generation


def distiller_forward(x, ws_packed, gb, b7):
    """x: (B, 536) float array.  ws_packed: 7 zero-padded pre-transposed bf16
    weights.  gb: (12, 256) f32 packed [gamma; beta] rows.  b7: (1, 536) f32."""
    B = x.shape[0]
    # bf16 activation input, zero-padded to a 128-lane multiple.  (Exact: padded
    # x columns only meet padded/zero W1 rows.)  Ideally upstream supplies
    # bf16/padded x directly so this is free.
    x_p = jnp.pad(x.astype(jnp.bfloat16), ((0, 0), (0, PDIMS[0] - DIMS[0])))
    inputs = [x_p] + list(ws_packed) + [gb, b7]
    vmem = pl.BlockSpec(memory_space=pltpu.MemorySpace.VMEM)
    return pl.pallas_call(
        distiller_kernel,
        out_shape=jax.ShapeDtypeStruct((B, OUT_DIM), jnp.float32),
        in_specs=[vmem] * len(inputs),
        out_specs=vmem,
        compiler_params=pltpu.CompilerParams(
            vmem_limit_bytes=_vmem_limit_bytes()),
    )(*inputs)


# ---------------------------------------------------------------------------
# Parameter init (nn.Linear / nn.BatchNorm1d shapes) + packing for the kernel
# ---------------------------------------------------------------------------
def init_params(key):
    ws, bs, gammas, betas = [], [], [], []
    for layer in range(N_LAYERS):
        fin, fout = DIMS[layer], DIMS[layer + 1]
        key, kw, kb = jax.random.split(key, 3)
        bound = fin ** -0.5
        # torch.nn.Linear stores (fout, fin); we keep the transpose (fin, fout).
        ws.append(jax.random.uniform(kw, (fin, fout), jnp.float32, -bound, bound))
        bs.append(jax.random.uniform(kb, (1, fout), jnp.float32, -bound, bound))
        if layer < N_BN:
            key, kg, kbt = jax.random.split(key, 3)
            # Non-trivial gamma/beta to exercise the affine path.
            gammas.append(1.0 + 0.1 * jax.random.normal(kg, (fout,), jnp.float32))
            betas.append(0.1 * jax.random.normal(kbt, (fout,), jnp.float32))
    return ws, bs, gammas, betas


def pack_params(ws, bs, gammas, betas):
    # Zero-pad weights to the lane-friendly PDIMS and cast to bf16 for the MXU.
    ws_packed = []
    for layer in range(N_LAYERS):
        fin, fout = DIMS[layer], DIMS[layer + 1]
        fin_p, fout_p = PDIMS[layer], PDIMS[layer + 1]
        w = jnp.zeros((fin_p, fout_p), jnp.float32).at[:fin, :fout].set(ws[layer])
        ws_packed.append(w.astype(jnp.bfloat16))
    # Pack gamma/beta rows; padded features stay 0 (-> exact zero activations).
    gb = jnp.zeros((2 * N_BN, GB_WIDTH), jnp.float32)
    for i in range(N_BN):
        fout = DIMS[i + 1]
        gb = gb.at[2 * i, :fout].set(gammas[i])
        gb = gb.at[2 * i + 1, :fout].set(betas[i])
    b7 = bs[-1]                                   # (1, 536) — the only kept bias
    return ws_packed, gb, b7


# ---------------------------------------------------------------------------
# Pure-JAX reference (mirrors bf16 matmul precision; keeps ALL biases, the
# unfused two-pass BN formula and unpadded shapes — validates the b1..b6
# cancellation, the one-pass variance and the zero-padding numerically)
# ---------------------------------------------------------------------------
def distiller_ref(x, ws, bs, gammas, betas):
    h = x.astype(jnp.float32)
    for layer in range(N_LAYERS):
        w = ws[layer].astype(jnp.bfloat16)
        h = jnp.dot(h.astype(jnp.bfloat16), w, preferred_element_type=jnp.float32)
        h = h + bs[layer]
        if layer < N_BN:
            mean = jnp.mean(h, axis=0, keepdims=True)
            var = jnp.mean((h - mean) ** 2, axis=0, keepdims=True)
            h = (h - mean) / jnp.sqrt(var + BN_EPS)
            h = h * gammas[layer][None, :] + betas[layer][None, :]
            h = jnp.maximum(h, 0.0)
    return h


if __name__ == "__main__":
    key = jax.random.PRNGKey(0)
    key, kx = jax.random.split(key)

    B = 8
    x = jax.random.normal(kx, (B, DIMS[0]), jnp.float32)
    ws, bs, gammas, betas = init_params(key)
    ws_packed, gb, b7 = pack_params(ws, bs, gammas, betas)

    out = jax.block_until_ready(distiller_forward(x, ws_packed, gb, b7))

    ref = distiller_ref(x, ws, bs, gammas, betas)
    assert out.shape == (B, OUT_DIM), out.shape
    max_err = float(jnp.max(jnp.abs(out - ref)))
    assert jnp.allclose(out, ref, atol=2e-2, rtol=2e-2), max_err

    print("KERNEL_OK")
</pallas_src>

<mosaic_0001>
module attributes {stable_mosaic.version = 11 : i64} {
  func.func @distiller_kernel(%arg0: memref<8x640xbf16, #tpu.memory_space<vmem>>, %arg1: memref<640x256xbf16, #tpu.memory_space<vmem>>, %arg2: memref<256x128xbf16, #tpu.memory_space<vmem>>, %arg3: memref<128x128xbf16, #tpu.memory_space<vmem>>, %arg4: memref<128x128xbf16, #tpu.memory_space<vmem>>, %arg5: memref<128x256xbf16, #tpu.memory_space<vmem>>, %arg6: memref<256x256xbf16, #tpu.memory_space<vmem>>, %arg7: memref<256x536xbf16, #tpu.memory_space<vmem>>, %arg8: memref<12x256xf32, #tpu.memory_space<vmem>>, %arg9: memref<1x536xf32, #tpu.memory_space<vmem>>, %arg10: memref<8x536xf32, #tpu.memory_space<vmem>>) attributes {dimension_semantics = [], scalar_prefetch = 0 : i64, scratch_operands = 0 : i64, tpu.core_type = #tpu.core_type<tc>} {
    %c0 = arith.constant 0 : index
    %c0_0 = arith.constant 0 : index
    %0 = vector.load %arg8[%c0, %c0_0] : memref<12x256xf32, #tpu.memory_space<vmem>>, vector<12x256xf32>
    %c0_1 = arith.constant 0 : index
    %c0_2 = arith.constant 0 : index
    %1 = vector.load %arg0[%c0_1, %c0_2] : memref<8x640xbf16, #tpu.memory_space<vmem>>, vector<8x640xbf16>
    %c0_3 = arith.constant 0 : index
    %c0_4 = arith.constant 0 : index
    %2 = vector.load %arg1[%c0_3, %c0_4] : memref<640x256xbf16, #tpu.memory_space<vmem>>, vector<640x256xbf16>
    %cst = arith.constant dense<0.000000e+00> : vector<8x256xf32>
    %3 = tpu.matmul %1, %2, %cst {dimension_numbers = #tpu.dot_dimension_numbers<[1], [0], [0], [1], [0, 0, 1, 1], [], []>} : vector<8x640xbf16>, vector<640x256xbf16>, vector<8x256xf32> -> vector<8x256xf32>
    %4 = vector.extract_strided_slice %0 {offsets = [0, 0], sizes = [1, 256], strides = [1, 1]} : vector<12x256xf32> to vector<1x256xf32>
    %5 = vector.extract_strided_slice %0 {offsets = [1, 0], sizes = [1, 256], strides = [1, 1]} : vector<12x256xf32> to vector<1x256xf32>
    %cst_5 = arith.constant dense<0.000000e+00> : vector<256xf32>
    %6 = vector.multi_reduction <add>, %3, %cst_5 [0] : vector<8x256xf32> to vector<256xf32>
    %7 = vector.shape_cast %6 : vector<256xf32> to vector<1x256xf32>
    %cst_6 = arith.constant 8.000000e+00 : f32
    %8 = vector.broadcast %cst_6 : f32 to vector<1x256xf32>
    %9 = arith.divf %7, %8 : vector<1x256xf32>
    %10 = arith.mulf %3, %3 : vector<8x256xf32>
    %cst_7 = arith.constant dense<0.000000e+00> : vector<256xf32>
    %11 = vector.multi_reduction <add>, %10, %cst_7 [0] : vector<8x256xf32> to vector<256xf32>
    %12 = vector.shape_cast %11 : vector<256xf32> to vector<1x256xf32>
    %cst_8 = arith.constant 8.000000e+00 : f32
    %13 = vector.broadcast %cst_8 : f32 to vector<1x256xf32>
    %14 = arith.divf %12, %13 : vector<1x256xf32>
    %15 = arith.mulf %9, %9 : vector<1x256xf32>
    %16 = arith.subf %14, %15 : vector<1x256xf32>
    %cst_9 = arith.constant 9.99999974E-6 : f32
    %17 = vector.broadcast %cst_9 : f32 to vector<1x256xf32>
    %18 = arith.addf %16, %17 : vector<1x256xf32>
    %19 = math.rsqrt %18 : vector<1x256xf32>
    %20 = arith.mulf %4, %19 : vector<1x256xf32>
    %21 = arith.mulf %9, %20 : vector<1x256xf32>
    %22 = arith.subf %5, %21 : vector<1x256xf32>
    %23 = vector.broadcast %20 : vector<1x256xf32> to vector<8x256xf32>
    %24 = arith.mulf %3, %23 : vector<8x256xf32>
    %25 = vector.broadcast %22 : vector<1x256xf32> to vector<8x256xf32>
    %26 = arith.addf %24, %25 : vector<8x256xf32>
    %cst_10 = arith.constant 0.000000e+00 : f32
    %27 = vector.broadcast %cst_10 : f32 to vector<8x256xf32>
    %28 = arith.maximumf %26, %27 : vector<8x256xf32>
    %29 = arith.truncf %28 : vector<8x256xf32> to vector<8x256xbf16>
    %c0_11 = arith.constant 0 : index
    %c0_12 = arith.constant 0 : index
    %30 = vector.load %arg2[%c0_11, %c0_12] : memref<256x128xbf16, #tpu.memory_space<vmem>>, vector<256x128xbf16>
    %cst_13 = arith.constant dense<0.000000e+00> : vector<8x128xf32>
    %31 = tpu.matmul %29, %30, %cst_13 {dimension_numbers = #tpu.dot_dimension_numbers<[1], [0], [0], [1], [0, 0, 1, 1], [], []>} : vector<8x256xbf16>, vector<256x128xbf16>, vector<8x128xf32> -> vector<8x128xf32>
    %32 = vector.extract_strided_slice %0 {offsets = [2, 0], sizes = [1, 128], strides = [1, 1]} : vector<12x256xf32> to vector<1x128xf32>
    %33 = vector.extract_strided_slice %0 {offsets = [3, 0], sizes = [1, 128], strides = [1, 1]} : vector<12x256xf32> to vector<1x128xf32>
    %cst_14 = arith.constant dense<0.000000e+00> : vector<128xf32>
    %34 = vector.multi_reduction <add>, %31, %cst_14 [0] : vector<8x128xf32> to vector<128xf32>
    %35 = vector.shape_cast %34 : vector<128xf32> to vector<1x128xf32>
    %cst_15 = arith.constant 8.000000e+00 : f32
    %36 = vector.broadcast %cst_15 : f32 to vector<1x128xf32>
    %37 = arith.divf %35, %36 : vector<1x128xf32>
    %38 = arith.mulf %31, %31 : vector<8x128xf32>
    %cst_16 = arith.constant dense<0.000000e+00> : vector<128xf32>
    %39 = vector.multi_reduction <add>, %38, %cst_16 [0] : vector<8x128xf32> to vector<128xf32>
    %40 = vector.shape_cast %39 : vector<128xf32> to vector<1x128xf32>
    %cst_17 = arith.constant 8.000000e+00 : f32
    %41 = vector.broadcast %cst_17 : f32 to vector<1x128xf32>
    %42 = arith.divf %40, %41 : vector<1x128xf32>
    %43 = arith.mulf %37, %37 : vector<1x128xf32>
    %44 = arith.subf %42, %43 : vector<1x128xf32>
    %cst_18 = arith.constant 9.99999974E-6 : f32
    %45 = vector.broadcast %cst_18 : f32 to vector<1x128xf32>
    %46 = arith.addf %44, %45 : vector<1x128xf32>
    %47 = math.rsqrt %46 : vector<1x128xf32>
    %48 = arith.mulf %32, %47 : vector<1x128xf32>
    %49 = arith.mulf %37, %48 : vector<1x128xf32>
    %50 = arith.subf %33, %49 : vector<1x128xf32>
    %51 = vector.broadcast %48 : vector<1x128xf32> to vector<8x128xf32>
    %52 = arith.mulf %31, %51 : vector<8x128xf32>
    %53 = vector.broadcast %50 : vector<1x128xf32> to vector<8x128xf32>
    %54 = arith.addf %52, %53 : vector<8x128xf32>
    %cst_19 = arith.constant 0.000000e+00 : f32
    %55 = vector.broadcast %cst_19 : f32 to vector<8x128xf32>
    %56 = arith.maximumf %54, %55 : vector<8x128xf32>
    %57 = arith.truncf %56 : vector<8x128xf32> to vector<8x128xbf16>
    %c0_20 = arith.constant 0 : index
    %c0_21 = arith.constant 0 : index
    %58 = vector.load %arg3[%c0_20, %c0_21] : memref<128x128xbf16, #tpu.memory_space<vmem>>, vector<128x128xbf16>
    %cst_22 = arith.constant dense<0.000000e+00> : vector<8x128xf32>
    %59 = tpu.matmul %57, %58, %cst_22 {dimension_numbers = #tpu.dot_dimension_numbers<[1], [0], [0], [1], [0, 0, 1, 1], [], []>} : vector<8x128xbf16>, vector<128x128xbf16>, vector<8x128xf32> -> vector<8x128xf32>
    %60 = vector.extract_strided_slice %0 {offsets = [4, 0], sizes = [1, 128], strides = [1, 1]} : vector<12x256xf32> to vector<1x128xf32>
    %61 = vector.extract_strided_slice %0 {offsets = [5, 0], sizes = [1, 128], strides = [1, 1]} : vector<12x256xf32> to vector<1x128xf32>
    %cst_23 = arith.constant dense<0.000000e+00> : vector<128xf32>
    %62 = vector.multi_reduction <add>, %59, %cst_23 [0] : vector<8x128xf32> to vector<128xf32>
    %63 = vector.shape_cast %62 : vector<128xf32> to vector<1x128xf32>
    %cst_24 = arith.constant 8.000000e+00 : f32
    %64 = vector.broadcast %cst_24 : f32 to vector<1x128xf32>
    %65 = arith.divf %63, %64 : vector<1x128xf32>
    %66 = arith.mulf %59, %59 : vector<8x128xf32>
    %cst_25 = arith.constant dense<0.000000e+00> : vector<128xf32>
    %67 = vector.multi_reduction <add>, %66, %cst_25 [0] : vector<8x128xf32> to vector<128xf32>
    %68 = vector.shape_cast %67 : vector<128xf32> to vector<1x128xf32>
    %cst_26 = arith.constant 8.000000e+00 : f32
    %69 = vector.broadcast %cst_26 : f32 to vector<1x128xf32>
    %70 = arith.divf %68, %69 : vector<1x128xf32>
    %71 = arith.mulf %65, %65 : vector<1x128xf32>
    %72 = arith.subf %70, %71 : vector<1x128xf32>
    %cst_27 = arith.constant 9.99999974E-6 : f32
    %73 = vector.broadcast %cst_27 : f32 to vector<1x128xf32>
    %74 = arith.addf %72, %73 : vector<1x128xf32>
    %75 = math.rsqrt %74 : vector<1x128xf32>
    %76 = arith.mulf %60, %75 : vector<1x128xf32>
    %77 = arith.mulf %65, %76 : vector<1x128xf32>
    %78 = arith.subf %61, %77 : vector<1x128xf32>
    %79 = vector.broadcast %76 : vector<1x128xf32> to vector<8x128xf32>
    %80 = arith.mulf %59, %79 : vector<8x128xf32>
    %81 = vector.broadcast %78 : vector<1x128xf32> to vector<8x128xf32>
    %82 = arith.addf %80, %81 : vector<8x128xf32>
    %cst_28 = arith.constant 0.000000e+00 : f32
    %83 = vector.broadcast %cst_28 : f32 to vector<8x128xf32>
    %84 = arith.maximumf %82, %83 : vector<8x128xf32>
    %85 = arith.truncf %84 : vector<8x128xf32> to vector<8x128xbf16>
    %c0_29 = arith.constant 0 : index
    %c0_30 = arith.constant 0 : index
    %86 = vector.load %arg4[%c0_29, %c0_30] : memref<128x128xbf16, #tpu.memory_space<vmem>>, vector<128x128xbf16>
    %cst_31 = arith.constant dense<0.000000e+00> : vector<8x128xf32>
    %87 = tpu.matmul %85, %86, %cst_31 {dimension_numbers = #tpu.dot_dimension_numbers<[1], [0], [0], [1], [0, 0, 1, 1], [], []>} : vector<8x128xbf16>, vector<128x128xbf16>, vector<8x128xf32> -> vector<8x128xf32>
    %88 = vector.extract_strided_slice %0 {offsets = [6, 0], sizes = [1, 128], strides = [1, 1]} : vector<12x256xf32> to vector<1x128xf32>
    %89 = vector.extract_strided_slice %0 {offsets = [7, 0], sizes = [1, 128], strides = [1, 1]} : vector<12x256xf32> to vector<1x128xf32>
    %cst_32 = arith.constant dense<0.000000e+00> : vector<128xf32>
    %90 = vector.multi_reduction <add>, %87, %cst_32 [0] : vector<8x128xf32> to vector<128xf32>
    %91 = vector.shape_cast %90 : vector<128xf32> to vector<1x128xf32>
    %cst_33 = arith.constant 8.000000e+00 : f32
    %92 = vector.broadcast %cst_33 : f32 to vector<1x128xf32>
    %93 = arith.divf %91, %92 : vector<1x128xf32>
    %94 = arith.mulf %87, %87 : vector<8x128xf32>
    %cst_34 = arith.constant dense<0.000000e+00> : vector<128xf32>
    %95 = vector.multi_reduction <add>, %94, %cst_34 [0] : vector<8x128xf32> to vector<128xf32>
    %96 = vector.shape_cast %95 : vector<128xf32> to vector<1x128xf32>
    %cst_35 = arith.constant 8.000000e+00 : f32
    %97 = vector.broadcast %cst_35 : f32 to vector<1x128xf32>
    %98 = arith.divf %96, %97 : vector<1x128xf32>
    %99 = arith.mulf %93, %93 : vector<1x128xf32>
    %100 = arith.subf %98, %99 : vector<1x128xf32>
    %cst_36 = arith.constant 9.99999974E-6 : f32
    %101 = vector.broadcast %cst_36 : f32 to vector<1x128xf32>
    %102 = arith.addf %100, %101 : vector<1x128xf32>
    %103 = math.rsqrt %102 : vector<1x128xf32>
    %104 = arith.mulf %88, %103 : vector<1x128xf32>
    %105 = arith.mulf %93, %104 : vector<1x128xf32>
    %106 = arith.subf %89, %105 : vector<1x128xf32>
    %107 = vector.broadcast %104 : vector<1x128xf32> to vector<8x128xf32>
    %108 = arith.mulf %87, %107 : vector<8x128xf32>
    %109 = vector.broadcast %106 : vector<1x128xf32> to vector<8x128xf32>
    %110 = arith.addf %108, %109 : vector<8x128xf32>
    %cst_37 = arith.constant 0.000000e+00 : f32
    %111 = vector.broadcast %cst_37 : f32 to vector<8x128xf32>
    %112 = arith.maximumf %110, %111 : vector<8x128xf32>
    %113 = arith.truncf %112 : vector<8x128xf32> to vector<8x128xbf16>
    %c0_38 = arith.constant 0 : index
    %c0_39 = arith.constant 0 : index
    %114 = vector.load %arg5[%c0_38, %c0_39] : memref<128x256xbf16, #tpu.memory_space<vmem>>, vector<128x256xbf16>
    %cst_40 = arith.constant dense<0.000000e+00> : vector<8x256xf32>
    %115 = tpu.matmul %113, %114, %cst_40 {dimension_numbers = #tpu.dot_dimension_numbers<[1], [0], [0], [1], [0, 0, 1, 1], [], []>} : vector<8x128xbf16>, vector<128x256xbf16>, vector<8x256xf32> -> vector<8x256xf32>
    %116 = vector.extract_strided_slice %0 {offsets = [8, 0], sizes = [1, 256], strides = [1, 1]} : vector<12x256xf32> to vector<1x256xf32>
    %117 = vector.extract_strided_slice %0 {offsets = [9, 0], sizes = [1, 256], strides = [1, 1]} : vector<12x256xf32> to vector<1x256xf32>
    %cst_41 = arith.constant dense<0.000000e+00> : vector<256xf32>
    %118 = vector.multi_reduction <add>, %115, %cst_41 [0] : vector<8x256xf32> to vector<256xf32>
    %119 = vector.shape_cast %118 : vector<256xf32> to vector<1x256xf32>
    %cst_42 = arith.constant 8.000000e+00 : f32
    %120 = vector.broadcast %cst_42 : f32 to vector<1x256xf32>
    %121 = arith.divf %119, %120 : vector<1x256xf32>
    %122 = arith.mulf %115, %115 : vector<8x256xf32>
    %cst_43 = arith.constant dense<0.000000e+00> : vector<256xf32>
    %123 = vector.multi_reduction <add>, %122, %cst_43 [0] : vector<8x256xf32> to vector<256xf32>
    %124 = vector.shape_cast %123 : vector<256xf32> to vector<1x256xf32>
    %cst_44 = arith.constant 8.000000e+00 : f32
    %125 = vector.broadcast %cst_44 : f32 to vector<1x256xf32>
    %126 = arith.divf %124, %125 : vector<1x256xf32>
    %127 = arith.mulf %121, %121 : vector<1x256xf32>
    %128 = arith.subf %126, %127 : vector<1x256xf32>
    %cst_45 = arith.constant 9.99999974E-6 : f32
    %129 = vector.broadcast %cst_45 : f32 to vector<1x256xf32>
    %130 = arith.addf %128, %129 : vector<1x256xf32>
    %131 = math.rsqrt %130 : vector<1x256xf32>
    %132 = arith.mulf %116, %131 : vector<1x256xf32>
    %133 = arith.mulf %121, %132 : vector<1x256xf32>
    %134 = arith.subf %117, %133 : vector<1x256xf32>
    %135 = vector.broadcast %132 : vector<1x256xf32> to vector<8x256xf32>
    %136 = arith.mulf %115, %135 : vector<8x256xf32>
    %137 = vector.broadcast %134 : vector<1x256xf32> to vector<8x256xf32>
    %138 = arith.addf %136, %137 : vector<8x256xf32>
    %cst_46 = arith.constant 0.000000e+00 : f32
    %139 = vector.broadcast %cst_46 : f32 to vector<8x256xf32>
    %140 = arith.maximumf %138, %139 : vector<8x256xf32>
    %141 = arith.truncf %140 : vector<8x256xf32> to vector<8x256xbf16>
    %c0_47 = arith.constant 0 : index
    %c0_48 = arith.constant 0 : index
    %142 = vector.load %arg6[%c0_47, %c0_48] : memref<256x256xbf16, #tpu.memory_space<vmem>>, vector<256x256xbf16>
    %cst_49 = arith.constant dense<0.000000e+00> : vector<8x256xf32>
    %143 = tpu.matmul %141, %142, %cst_49 {dimension_numbers = #tpu.dot_dimension_numbers<[1], [0], [0], [1], [0, 0, 1, 1], [], []>} : vector<8x256xbf16>, vector<256x256xbf16>, vector<8x256xf32> -> vector<8x256xf32>
    %144 = vector.extract_strided_slice %0 {offsets = [10, 0], sizes = [1, 256], strides = [1, 1]} : vector<12x256xf32> to vector<1x256xf32>
    %145 = vector.extract_strided_slice %0 {offsets = [11, 0], sizes = [1, 256], strides = [1, 1]} : vector<12x256xf32> to vector<1x256xf32>
    %cst_50 = arith.constant dense<0.000000e+00> : vector<256xf32>
    %146 = vector.multi_reduction <add>, %143, %cst_50 [0] : vector<8x256xf32> to vector<256xf32>
    %147 = vector.shape_cast %146 : vector<256xf32> to vector<1x256xf32>
    %cst_51 = arith.constant 8.000000e+00 : f32
    %148 = vector.broadcast %cst_51 : f32 to vector<1x256xf32>
    %149 = arith.divf %147, %148 : vector<1x256xf32>
    %150 = arith.mulf %143, %143 : vector<8x256xf32>
    %cst_52 = arith.constant dense<0.000000e+00> : vector<256xf32>
    %151 = vector.multi_reduction <add>, %150, %cst_52 [0] : vector<8x256xf32> to vector<256xf32>
    %152 = vector.shape_cast %151 : vector<256xf32> to vector<1x256xf32>
    %cst_53 = arith.constant 8.000000e+00 : f32
    %153 = vector.broadcast %cst_53 : f32 to vector<1x256xf32>
    %154 = arith.divf %152, %153 : vector<1x256xf32>
    %155 = arith.mulf %149, %149 : vector<1x256xf32>
    %156 = arith.subf %154, %155 : vector<1x256xf32>
    %cst_54 = arith.constant 9.99999974E-6 : f32
    %157 = vector.broadcast %cst_54 : f32 to vector<1x256xf32>
    %158 = arith.addf %156, %157 : vector<1x256xf32>
    %159 = math.rsqrt %158 : vector<1x256xf32>
    %160 = arith.mulf %144, %159 : vector<1x256xf32>
    %161 = arith.mulf %149, %160 : vector<1x256xf32>
    %162 = arith.subf %145, %161 : vector<1x256xf32>
    %163 = vector.broadcast %160 : vector<1x256xf32> to vector<8x256xf32>
    %164 = arith.mulf %143, %163 : vector<8x256xf32>
    %165 = vector.broadcast %162 : vector<1x256xf32> to vector<8x256xf32>
    %166 = arith.addf %164, %165 : vector<8x256xf32>
    %cst_55 = arith.constant 0.000000e+00 : f32
    %167 = vector.broadcast %cst_55 : f32 to vector<8x256xf32>
    %168 = arith.maximumf %166, %167 : vector<8x256xf32>
    %169 = arith.truncf %168 : vector<8x256xf32> to vector<8x256xbf16>
    %c0_56 = arith.constant 0 : index
    %c0_57 = arith.constant 0 : index
    %170 = vector.load %arg7[%c0_56, %c0_57] : memref<256x536xbf16, #tpu.memory_space<vmem>>, vector<256x536xbf16>
    %cst_58 = arith.constant dense<0.000000e+00> : vector<8x536xf32>
    %171 = tpu.matmul %169, %170, %cst_58 {dimension_numbers = #tpu.dot_dimension_numbers<[1], [0], [0], [1], [0, 0, 1, 1], [], []>} : vector<8x256xbf16>, vector<256x536xbf16>, vector<8x536xf32> -> vector<8x536xf32>
    %c0_59 = arith.constant 0 : index
    %c0_60 = arith.constant 0 : index
    %172 = vector.load %arg9[%c0_59, %c0_60] : memref<1x536xf32, #tpu.memory_space<vmem>>, vector<1x536xf32>
    %173 = vector.broadcast %172 : vector<1x536xf32> to vector<8x536xf32>
    %174 = arith.addf %171, %173 : vector<8x536xf32>
    %c0_61 = arith.constant 0 : index
    %c0_62 = arith.constant 0 : index
    %175 = vector.load %arg10[%c0_61, %c0_62] : memref<8x536xf32, #tpu.memory_space<vmem>>, vector<8x536xf32>
    tpu.vector_store %arg10[%c0_61, %c0_62], %174 {strides = array<i32>} : memref<8x536xf32, #tpu.memory_space<vmem>>, vector<8x536xf32>,
    return
  }
}

</mosaic_0001>

<llo_original>
// kernel: tpu_custom_call.1
$region0: #{tpu_custom_call.1}
  #allocation0 [shape = 'u32[]', space=smem, size = 0x4, offset = 0x4, fixed_abs, tag = 'smem constant byte address 0x4 - core index']
  #allocation1 [shape = 'u32[144,128]{1,0:T(1,128)}', space=vmem, size = 0x12000, scoped, tag = 'internal scratch']
  %s0 = inlined_call_operand.hbm [shape: bf16[8,640], index: 0, kind: input, shape index: {}]
  %s1 = inlined_call_operand.vmem [shape: bf16[640,256], index: 1, kind: input, shape index: {}]
  %s2 = inlined_call_operand.vmem [shape: bf16[256,128], index: 2, kind: input, shape index: {}]
  %s3 = inlined_call_operand.hbm [shape: bf16[128,128], index: 3, kind: input, shape index: {}]
  %s4 = inlined_call_operand.hbm [shape: bf16[128,128], index: 4, kind: input, shape index: {}]
  %s5 = inlined_call_operand.vmem [shape: bf16[128,256], index: 5, kind: input, shape index: {}]
  %s6 = inlined_call_operand.vmem [shape: bf16[256,256], index: 6, kind: input, shape index: {}]
  %s7 = inlined_call_operand.vmem [shape: bf16[256,536], index: 7, kind: input, shape index: {}]
  %s8 = inlined_call_operand.vmem [shape: f32[12,256], index: 8, kind: input, shape index: {}]
  %s9 = inlined_call_operand.vmem [shape: f32[1,536], index: 9, kind: input, shape index: {}]
  %s10 = inlined_call_operand.hbm [shape: f32[8,536], index: 10, kind: output, shape index: {}]
  %s11 = sld [smem:[#allocation0]]
  $region62: #{tpu_custom_call.1} parent=0
    _
  %s13 = ssub.s32 1, %s11
  %s14 = scalar_select 0, %s13, %s11
  $region1: #{tpu_custom_call.1} parent=0
    #allocation2 [shape = 'u8[10240]{0}', space=vmem, size = 0x2800, scoped, tag = 'input window, operand 0, single buffered']
    #allocation3 [shape = 's32[1]{0}', space=sflag, size = 0x4, scoped, tag = 'scoped memory for tpu_custom_call.1']
    #allocation4 [shape = 's32[1]{0}', space=sflag, size = 0x4, scoped, tag = 'scoped memory for tpu_custom_call.1']
    #allocation5 [shape = 'u8[32768]{0}', space=vmem, size = 0x8000, scoped, tag = 'input window, operand 3, single buffered']
    #allocation6 [shape = 's32[1]{0}', space=sflag, size = 0x4, scoped, tag = 'scoped memory for tpu_custom_call.1']
    #allocation7 [shape = 'u8[32768]{0}', space=vmem, size = 0x8000, scoped, tag = 'input window, operand 4, single buffered']
    #allocation8 [shape = 'u8[20480]{0}', space=vmem, size = 0x5000, scoped, tag = 'output window, operand 0, single buffered']
    %15 = vsyncpa [#allocation3], 0
    %16 = vsyncpa [#allocation6], 0
    %17 = vsyncpa [#allocation4], 0
    // Predicated region
    $region2: #{tpu_custom_call.1} parent=1 // pred_check
      _
    $region3: #{tpu_custom_call.1} parent=1 // pred_check_branch
      %19 = sbr.rel (0) target = $region5
    $region4: #{tpu_custom_call.1} parent=1 // pred_region
      %s21 = ssub.s32 320, 320
      %22 = vsyncadd [#allocation3], %s21
      %s24 = sshll.u32 [#allocation2], 4
      %s25 = int_to_ptr.vmem [resolvable:$true] %s24
      %27 = dma.hbm_to_vmem [thread:$0]  %s0, 320, %s25, [#allocation3]
    $region5: #{tpu_custom_call.1} parent=1 // pred_fallthru
      _
    // Predicated region
    $region6: #{tpu_custom_call.1} parent=1 // pred_check
      _
    $region7: #{tpu_custom_call.1} parent=1 // pred_check_branch
      %29 = sbr.rel (0) target = $region9
    $region8: #{tpu_custom_call.1} parent=1 // pred_region
      _
    $region9: #{tpu_custom_call.1} parent=1 // pred_fallthru
      _
    // Predicated region
    $region10: #{tpu_custom_call.1} parent=1 // pred_check
      _
    $region11: #{tpu_custom_call.1} parent=1 // pred_check_branch
      %31 = sbr.rel (0) target = $region13
    $region12: #{tpu_custom_call.1} parent=1 // pred_region
      _
    $region13: #{tpu_custom_call.1} parent=1 // pred_fallthru
      _
    // Predicated region
    $region14: #{tpu_custom_call.1} parent=1 // pred_check
      _
    $region15: #{tpu_custom_call.1} parent=1 // pred_check_branch
      %33 = sbr.rel (0) target = $region17
    $region16: #{tpu_custom_call.1} parent=1 // pred_region
      %s35 = ssub.s32 1024, 1024
      %36 = vsyncadd [#allocation6], %s35
      %s37 = sshll.u32 [#allocation5], 4
      %s38 = int_to_ptr.vmem [resolvable:$true] %s37
      %43 = dma.hbm_to_vmem [thread:$0]  %s3, 1024, %s38, [#allocation6], 64, 64, 4
    $region17: #{tpu_custom_call.1} parent=1 // pred_fallthru
      _
    // Predicated region
    $region18: #{tpu_custom_call.1} parent=1 // pred_check
      _
    $region19: #{tpu_custom_call.1} parent=1 // pred_check_branch
      %45 = sbr.rel (0) target = $region21
    $region20: #{tpu_custom_call.1} parent=1 // pred_region
      %s47 = ssub.s32 1024, 1024
      %48 = vsyncadd [#allocation6], %s47
      %s49 = sshll.u32 [#allocation7], 4
      %s50 = int_to_ptr.vmem [resolvable:$true] %s49
      %55 = dma.hbm_to_vmem [thread:$0]  %s4, 1024, %s50, [#allocation6], 64, 64, 4
    $region21: #{tpu_custom_call.1} parent=1 // pred_fallthru
      _
    // Predicated region
    $region22: #{tpu_custom_call.1} parent=1 // pred_check
      _
    $region23: #{tpu_custom_call.1} parent=1 // pred_check_branch
      %57 = sbr.rel (0) target = $region25
    $region24: #{tpu_custom_call.1} parent=1 // pred_region
      _
    $region25: #{tpu_custom_call.1} parent=1 // pred_fallthru
      _
    // Predicated region
    $region26: #{tpu_custom_call.1} parent=1 // pred_check
      _
    $region27: #{tpu_custom_call.1} parent=1 // pred_check_branch
      %59 = sbr.rel (0) target = $region29
    $region28: #{tpu_custom_call.1} parent=1 // pred_region
      _
    $region29: #{tpu_custom_call.1} parent=1 // pred_fallthru
      _
    // Predicated region
    $region30: #{tpu_custom_call.1} parent=1 // pred_check
      _
    $region31: #{tpu_custom_call.1} parent=1 // pred_check_branch
      %61 = sbr.rel (0) target = $region33
    $region32: #{tpu_custom_call.1} parent=1 // pred_region
      _
    $region33: #{tpu_custom_call.1} parent=1 // pred_fallthru
      _
    // Predicated region
    $region34: #{tpu_custom_call.1} parent=1 // pred_check
      _
    $region35: #{tpu_custom_call.1} parent=1 // pred_check_branch
      %63 = sbr.rel (0) target = $region37
    $region36: #{tpu_custom_call.1} parent=1 // pred_region
      _
    $region37: #{tpu_custom_call.1} parent=1 // pred_fallthru
      _
    // Predicated region
    $region38: #{tpu_custom_call.1} parent=1 // pred_check
      _
    $region39: #{tpu_custom_call.1} parent=1 // pred_check_branch
      %65 = sbr.rel (0) target = $region41
    $region40: #{tpu_custom_call.1} parent=1 // pred_region
      _
    $region41: #{tpu_custom_call.1} parent=1 // pred_fallthru
      _
    // Predicated region
    $region42: #{tpu_custom_call.1} parent=1 // pred_check
      _
    $region43: #{tpu_custom_call.1} parent=1 // pred_check_branch
      %67 = sbr.rel (0) target = $region45
    $region44: #{tpu_custom_call.1} parent=1 // pred_region
      %68 = dma.done [#allocation3], 320
    $region45: #{tpu_custom_call.1} parent=1 // pred_fallthru
      _
    // Predicated region
    $region46: #{tpu_custom_call.1} parent=1 // pred_check
      _
    $region47: #{tpu_custom_call.1} parent=1 // pred_check_branch
      %70 = sbr.rel (0) target = $region49
    $region48: #{tpu_custom_call.1} parent=1 // pred_region
      %71 = dma.done [#allocation6], 1024
    $region49: #{tpu_custom_call.1} parent=1 // pred_fallthru
      _
    // Predicated region
    $region50: #{tpu_custom_call.1} parent=1 // pred_check
      _
    $region51: #{tpu_custom_call.1} parent=1 // pred_check_branch
      %73 = sbr.rel (0) target = $region53
    $region52: #{tpu_custom_call.1} parent=1 // pred_region
      %74 = dma.done [#allocation6], 1024
    $region53: #{tpu_custom_call.1} parent=1 // pred_fallthru
      _
    %v76 = vld [vmem:[%s8] sm:$0xff]
    %v77 = vld [vmem:[%s8 + $0x8] sm:$0xff]
    %v78 = vld [vmem:[%s8 + $0x10] sm:$0xf]
    %v79 = vld [vmem:[%s8 + $0x18] sm:$0xf]
    %v80 = vld [vmem:[#allocation2] sm:$0xff]
    %v81 = vld [vmem:[#allocation2 + $0x8] sm:$0xff]
    %v82 = vld [vmem:[#allocation2 + $0x10] sm:$0xf]
    %v83 = vld [vmem:[%s1] sm:$0xff]
    %v84 = vld [vmem:[%s1 + $0x8] sm:$0xff]
    %v85 = vld [vmem:[%s1 + $0x10] sm:$0xff]
    %v86 = vld [vmem:[%s1 + $0x18] sm:$0xff]
    %v87 = vld [vmem:[%s1 + $0x20] sm:$0xff]
    %v88 = vld [vmem:[%s1 + $0x28] sm:$0xff]
    %v89 = vld [vmem:[%s1 + $0x30] sm:$0xff]
    %v90 = vld [vmem:[%s1 + $0x38] sm:$0xff]
    %v91 = vld [vmem:[%s1 + $0x40] sm:$0xff]
    %v92 = vld [vmem:[%s1 + $0x48] sm:$0xff]
    %v93 = vld [vmem:[%s1 + $0x50] sm:$0xff]
    %v94 = vld [vmem:[%s1 + $0x58] sm:$0xff]
    %v95 = vld [vmem:[%s1 + $0x60] sm:$0xff]
    %v96 = vld [vmem:[%s1 + $0x68] sm:$0xff]
    %v97 = vld [vmem:[%s1 + $0x70] sm:$0xff]
    %v98 = vld [vmem:[%s1 + $0x78] sm:$0xff]
    %v99 = vld [vmem:[%s1 + $0x80] sm:$0xff]
    %v100 = vld [vmem:[%s1 + $0x88] sm:$0xff]
    %v101 = vld [vmem:[%s1 + $0x90] sm:$0xff]
    %v102 = vld [vmem:[%s1 + $0x98] sm:$0xff]
    %v103 = vld [vmem:[%s1 + $0xa0] sm:$0xff]
    %v104 = vld [vmem:[%s1 + $0xa8] sm:$0xff]
    %v105 = vld [vmem:[%s1 + $0xb0] sm:$0xff]
    %v106 = vld [vmem:[%s1 + $0xb8] sm:$0xff]
    %v107 = vld [vmem:[%s1 + $0xc0] sm:$0xff]
    %v108 = vld [vmem:[%s1 + $0xc8] sm:$0xff]
    %v109 = vld [vmem:[%s1 + $0xd0] sm:$0xff]
    %v110 = vld [vmem:[%s1 + $0xd8] sm:$0xff]
    %v111 = vld [vmem:[%s1 + $0xe0] sm:$0xff]
    %v112 = vld [vmem:[%s1 + $0xe8] sm:$0xff]
    %v113 = vld [vmem:[%s1 + $0xf0] sm:$0xff]
    %v114 = vld [vmem:[%s1 + $0xf8] sm:$0xff]
    %v115 = vld [vmem:[%s1 + $0x100] sm:$0xff]
    %v116 = vld [vmem:[%s1 + $0x108] sm:$0xff]
    %v117 = vld [vmem:[%s1 + $0x110] sm:$0xff]
    %v118 = vld [vmem:[%s1 + $0x118] sm:$0xff]
    %v119 = vld [vmem:[%s1 + $0x120] sm:$0xff]
    %v120 = vld [vmem:[%s1 + $0x128] sm:$0xff]
    %v121 = vld [vmem:[%s1 + $0x130] sm:$0xff]
    %v122 = vld [vmem:[%s1 + $0x138] sm:$0xff]
    %v123 = vld [vmem:[%s1 + $0x140] sm:$0xff]
    %v124 = vld [vmem:[%s1 + $0x148] sm:$0xff]
    %v125 = vld [vmem:[%s1 + $0x150] sm:$0xff]
    %v126 = vld [vmem:[%s1 + $0x158] sm:$0xff]
    %v127 = vld [vmem:[%s1 + $0x160] sm:$0xff]
    %v128 = vld [vmem:[%s1 + $0x168] sm:$0xff]
    %v129 = vld [vmem:[%s1 + $0x170] sm:$0xff]
    %v130 = vld [vmem:[%s1 + $0x178] sm:$0xff]
    %v131 = vld [vmem:[%s1 + $0x180] sm:$0xff]
    %v132 = vld [vmem:[%s1 + $0x188] sm:$0xff]
    %v133 = vld [vmem:[%s1 + $0x190] sm:$0xff]
    %v134 = vld [vmem:[%s1 + $0x198] sm:$0xff]
    %v135 = vld [vmem:[%s1 + $0x1a0] sm:$0xff]
    %v136 = vld [vmem:[%s1 + $0x1a8] sm:$0xff]
    %v137 = vld [vmem:[%s1 + $0x1b0] sm:$0xff]
    %v138 = vld [vmem:[%s1 + $0x1b8] sm:$0xff]
    %v139 = vld [vmem:[%s1 + $0x1c0] sm:$0xff]
    %v140 = vld [vmem:[%s1 + $0x1c8] sm:$0xff]
    %v141 = vld [vmem:[%s1 + $0x1d0] sm:$0xff]
    %v142 = vld [vmem:[%s1 + $0x1d8] sm:$0xff]
    %v143 = vld [vmem:[%s1 + $0x1e0] sm:$0xff]
    %v144 = vld [vmem:[%s1 + $0x1e8] sm:$0xff]
    %v145 = vld [vmem:[%s1 + $0x1f0] sm:$0xff]
    %v146 = vld [vmem:[%s1 + $0x1f8] sm:$0xff]
    %v147 = vld [vmem:[%s1 + $0x200] sm:$0xff]
    %v148 = vld [vmem:[%s1 + $0x208] sm:$0xff]
    %v149 = vld [vmem:[%s1 + $0x210] sm:$0xff]
    %v150 = vld [vmem:[%s1 + $0x218] sm:$0xff]
    %v151 = vld [vmem:[%s1 + $0x220] sm:$0xff]
    %v152 = vld [vmem:[%s1 + $0x228] sm:$0xff]
    %v153 = vld [vmem:[%s1 + $0x230] sm:$0xff]
    %v154 = vld [vmem:[%s1 + $0x238] sm:$0xff]
    %v155 = vld [vmem:[%s1 + $0x240] sm:$0xff]
    %v156 = vld [vmem:[%s1 + $0x248] sm:$0xff]
    %v157 = vld [vmem:[%s1 + $0x250] sm:$0xff]
    %v158 = vld [vmem:[%s1 + $0x258] sm:$0xff]
    %v159 = vld [vmem:[%s1 + $0x260] sm:$0xff]
    %v160 = vld [vmem:[%s1 + $0x268] sm:$0xff]
    %v161 = vld [vmem:[%s1 + $0x270] sm:$0xff]
    %v162 = vld [vmem:[%s1 + $0x278] sm:$0xff]
    %v166 = vunpack.c.l.b16 %v80
    %v167 = vunpack.c.h.b16 %v80
    %v168 = vunpack.c.l.b16 %v81
    %v169 = vunpack.c.h.b16 %v81
    %v170 = vunpack.c.l.b16 %v82
    %v171 = vpack.c.b16 %v166, %v166
    %v172 = vpack.c.b16 %v167, %v167
    %v173 = vpack.c.b16 %v168, %v168
    %v174 = vpack.c.b16 %v169, %v169
    %v175 = vpack.c.b16 %v170, %v170
    %v261 = vunpack.c.l.b16 %v83
    %v262 = vunpack.c.h.b16 %v83
    %v263 = vunpack.c.l.b16 %v84
    %v264 = vunpack.c.h.b16 %v84
    %v265 = vunpack.c.l.b16 %v85
    %v266 = vunpack.c.h.b16 %v85
    %v267 = vunpack.c.l.b16 %v86
    %v268 = vunpack.c.h.b16 %v86
    %v269 = vunpack.c.l.b16 %v87
    %v270 = vunpack.c.h.b16 %v87
    %v271 = vunpack.c.l.b16 %v88
    %v272 = vunpack.c.h.b16 %v88
    %v273 = vunpack.c.l.b16 %v89
    %v274 = vunpack.c.h.b16 %v89
    %v275 = vunpack.c.l.b16 %v90
    %v276 = vunpack.c.h.b16 %v90
    %v277 = vunpack.c.l.b16 %v91
    %v278 = vunpack.c.h.b16 %v91
    %v279 = vunpack.c.l.b16 %v92
    %v280 = vunpack.c.h.b16 %v92
    %v281 = vunpack.c.l.b16 %v93
    %v282 = vunpack.c.h.b16 %v93
    %v283 = vunpack.c.l.b16 %v94
    %v284 = vunpack.c.h.b16 %v94
    %v285 = vunpack.c.l.b16 %v95
    %v286 = vunpack.c.h.b16 %v95
    %v287 = vunpack.c.l.b16 %v96
    %v288 = vunpack.c.h.b16 %v96
    %v289 = vunpack.c.l.b16 %v97
    %v290 = vunpack.c.h.b16 %v97
    %v291 = vunpack.c.l.b16 %v98
    %v292 = vunpack.c.h.b16 %v98
    %v293 = vunpack.c.l.b16 %v99
    %v294 = vunpack.c.h.b16 %v99
    %v295 = vunpack.c.l.b16 %v100
    %v296 = vunpack.c.h.b16 %v100
    %v297 = vunpack.c.l.b16 %v101
    %v298 = vunpack.c.h.b16 %v101
    %v299 = vunpack.c.l.b16 %v102
    %v300 = vunpack.c.h.b16 %v102
    %v301 = vunpack.c.l.b16 %v103
    %v302 = vunpack.c.h.b16 %v103
    %v303 = vunpack.c.l.b16 %v104
    %v304 = vunpack.c.h.b16 %v104
    %v305 = vunpack.c.l.b16 %v105
    %v306 = vunpack.c.h.b16 %v105
    %v307 = vunpack.c.l.b16 %v106
    %v308 = vunpack.c.h.b16 %v106
    %v309 = vunpack.c.l.b16 %v107
    %v310 = vunpack.c.h.b16 %v107
    %v311 = vunpack.c.l.b16 %v108
    %v312 = vunpack.c.h.b16 %v108
    %v313 = vunpack.c.l.b16 %v109
    %v314 = vunpack.c.h.b16 %v109
    %v315 = vunpack.c.l.b16 %v110
    %v316 = vunpack.c.h.b16 %v110
    %v317 = vunpack.c.l.b16 %v111
    %v318 = vunpack.c.h.b16 %v111
    %v319 = vunpack.c.l.b16 %v112
    %v320 = vunpack.c.h.b16 %v112
    %v321 = vunpack.c.l.b16 %v113
    %v322 = vunpack.c.h.b16 %v113
    %v323 = vunpack.c.l.b16 %v114
    %v324 = vunpack.c.h.b16 %v114
    %v325 = vunpack.c.l.b16 %v115
    %v326 = vunpack.c.h.b16 %v115
    %v327 = vunpack.c.l.b16 %v116
    %v328 = vunpack.c.h.b16 %v116
    %v329 = vunpack.c.l.b16 %v117
    %v330 = vunpack.c.h.b16 %v117
    %v331 = vunpack.c.l.b16 %v118
    %v332 = vunpack.c.h.b16 %v118
    %v333 = vunpack.c.l.b16 %v119
    %v334 = vunpack.c.h.b16 %v119
    %v335 = vunpack.c.l.b16 %v120
    %v336 = vunpack.c.h.b16 %v120
    %v337 = vunpack.c.l.b16 %v121
    %v338 = vunpack.c.h.b16 %v121
    %v339 = vunpack.c.l.b16 %v122
    %v340 = vunpack.c.h.b16 %v122
    %v341 = vunpack.c.l.b16 %v123
    %v342 = vunpack.c.h.b16 %v123
    %v343 = vunpack.c.l.b16 %v124
    %v344 = vunpack.c.h.b16 %v124
    %v345 = vunpack.c.l.b16 %v125
    %v346 = vunpack.c.h.b16 %v125
    %v347 = vunpack.c.l.b16 %v126
    %v348 = vunpack.c.h.b16 %v126
    %v349 = vunpack.c.l.b16 %v127
    %v350 = vunpack.c.h.b16 %v127
    %v351 = vunpack.c.l.b16 %v128
    %v352 = vunpack.c.h.b16 %v128
    %v353 = vunpack.c.l.b16 %v129
    %v354 = vunpack.c.h.b16 %v129
    %v355 = vunpack.c.l.b16 %v130
    %v356 = vunpack.c.h.b16 %v130
    %v357 = vunpack.c.l.b16 %v131
    %v358 = vunpack.c.h.b16 %v131
    %v359 = vunpack.c.l.b16 %v132
    %v360 = vunpack.c.h.b16 %v132
    %v361 = vunpack.c.l.b16 %v133
    %v362 = vunpack.c.h.b16 %v133
    %v363 = vunpack.c.l.b16 %v134
    %v364 = vunpack.c.h.b16 %v134
    %v365 = vunpack.c.l.b16 %v135
    %v366 = vunpack.c.h.b16 %v135
    %v367 = vunpack.c.l.b16 %v136
    %v368 = vunpack.c.h.b16 %v136
    %v369 = vunpack.c.l.b16 %v137
    %v370 = vunpack.c.h.b16 %v137
    %v371 = vunpack.c.l.b16 %v138
    %v372 = vunpack.c.h.b16 %v138
    %v373 = vunpack.c.l.b16 %v139
    %v374 = vunpack.c.h.b16 %v139
    %v375 = vunpack.c.l.b16 %v140
    %v376 = vunpack.c.h.b16 %v140
    %v377 = vunpack.c.l.b16 %v141
    %v378 = vunpack.c.h.b16 %v141
    %v379 = vunpack.c.l.b16 %v142
    %v380 = vunpack.c.h.b16 %v142
    %v381 = vunpack.c.l.b16 %v143
    %v382 = vunpack.c.h.b16 %v143
    %v383 = vunpack.c.l.b16 %v144
    %v384 = vunpack.c.h.b16 %v144
    %v385 = vunpack.c.l.b16 %v145
    %v386 = vunpack.c.h.b16 %v145
    %v387 = vunpack.c.l.b16 %v146
    %v388 = vunpack.c.h.b16 %v146
    %v389 = vunpack.c.l.b16 %v147
    %v390 = vunpack.c.h.b16 %v147
    %v391 = vunpack.c.l.b16 %v148
    %v392 = vunpack.c.h.b16 %v148
    %v393 = vunpack.c.l.b16 %v149
    %v394 = vunpack.c.h.b16 %v149
    %v395 = vunpack.c.l.b16 %v150
    %v396 = vunpack.c.h.b16 %v150
    %v397 = vunpack.c.l.b16 %v151
    %v398 = vunpack.c.h.b16 %v151
    %v399 = vunpack.c.l.b16 %v152
    %v400 = vunpack.c.h.b16 %v152
    %v401 = vunpack.c.l.b16 %v153
    %v402 = vunpack.c.h.b16 %v153
    %v403 = vunpack.c.l.b16 %v154
    %v404 = vunpack.c.h.b16 %v154
    %v405 = vunpack.c.l.b16 %v155
    %v406 = vunpack.c.h.b16 %v155
    %v407 = vunpack.c.l.b16 %v156
    %v408 = vunpack.c.h.b16 %v156
    %v409 = vunpack.c.l.b16 %v157
    %v410 = vunpack.c.h.b16 %v157
    %v411 = vunpack.c.l.b16 %v158
    %v412 = vunpack.c.h.b16 %v158
    %v413 = vunpack.c.l.b16 %v159
    %v414 = vunpack.c.h.b16 %v159
    %v415 = vunpack.c.l.b16 %v160
    %v416 = vunpack.c.h.b16 %v160
    %v417 = vunpack.c.l.b16 %v161
    %v418 = vunpack.c.h.b16 %v161
    %v419 = vunpack.c.l.b16 %v162
    %v420 = vunpack.c.h.b16 %v162
    %v421 = vpack.c.b16 %v263, %v261
    %v422 = vpack.c.b16 %v264, %v262
    %v423 = vpack.c.b16 %v267, %v265
    %v424 = vpack.c.b16 %v268, %v266
    %v425 = vpack.c.b16 %v271, %v269
    %v426 = vpack.c.b16 %v272, %v270
    %v427 = vpack.c.b16 %v275, %v273
    %v428 = vpack.c.b16 %v276, %v274
    %v429 = vpack.c.b16 %v279, %v277
    %v430 = vpack.c.b16 %v280, %v278
    %v431 = vpack.c.b16 %v283, %v281
    %v432 = vpack.c.b16 %v284, %v282
    %v433 = vpack.c.b16 %v287, %v285
    %v434 = vpack.c.b16 %v288, %v286
    %v435 = vpack.c.b16 %v291, %v289
    %v436 = vpack.c.b16 %v292, %v290
    %v437 = vpack.c.b16 %v295, %v293
    %v438 = vpack.c.b16 %v296, %v294
    %v439 = vpack.c.b16 %v299, %v297
    %v440 = vpack.c.b16 %v300, %v298
    %v441 = vpack.c.b16 %v303, %v301
    %v442 = vpack.c.b16 %v304, %v302
    %v443 = vpack.c.b16 %v307, %v305
    %v444 = vpack.c.b16 %v308, %v306
    %v445 = vpack.c.b16 %v311, %v309
    %v446 = vpack.c.b16 %v312, %v310
    %v447 = vpack.c.b16 %v315, %v313
    %v448 = vpack.c.b16 %v316, %v314
    %v449 = vpack.c.b16 %v319, %v317
    %v450 = vpack.c.b16 %v320, %v318
    %v451 = vpack.c.b16 %v323, %v321
    %v452 = vpack.c.b16 %v324, %v322
    %v453 = vpack.c.b16 %v327, %v325
    %v454 = vpack.c.b16 %v328, %v326
    %v455 = vpack.c.b16 %v331, %v329
    %v456 = vpack.c.b16 %v332, %v330
    %v457 = vpack.c.b16 %v335, %v333
    %v458 = vpack.c.b16 %v336, %v334
    %v459 = vpack.c.b16 %v339, %v337
    %v460 = vpack.c.b16 %v340, %v338
    %v461 = vpack.c.b16 %v343, %v341
    %v462 = vpack.c.b16 %v344, %v342
    %v463 = vpack.c.b16 %v347, %v345
    %v464 = vpack.c.b16 %v348, %v346
    %v465 = vpack.c.b16 %v351, %v349
    %v466 = vpack.c.b16 %v352, %v350
    %v467 = vpack.c.b16 %v355, %v353
    %v468 = vpack.c.b16 %v356, %v354
    %v469 = vpack.c.b16 %v359, %v357
    %v470 = vpack.c.b16 %v360, %v358
    %v471 = vpack.c.b16 %v363, %v361
    %v472 = vpack.c.b16 %v364, %v362
    %v473 = vpack.c.b16 %v367, %v365
    %v474 = vpack.c.b16 %v368, %v366
    %v475 = vpack.c.b16 %v371, %v369
    %v476 = vpack.c.b16 %v372, %v370
    %v477 = vpack.c.b16 %v375, %v373
    %v478 = vpack.c.b16 %v376, %v374
    %v479 = vpack.c.b16 %v379, %v377
    %v480 = vpack.c.b16 %v380, %v378
    %v481 = vpack.c.b16 %v383, %v381
    %v482 = vpack.c.b16 %v384, %v382
    %v483 = vpack.c.b16 %v387, %v385
    %v484 = vpack.c.b16 %v388, %v386
    %v485 = vpack.c.b16 %v391, %v389
    %v486 = vpack.c.b16 %v392, %v390
    %v487 = vpack.c.b16 %v395, %v393
    %v488 = vpack.c.b16 %v396, %v394
    %v489 = vpack.c.b16 %v399, %v397
    %v490 = vpack.c.b16 %v400, %v398
    %v491 = vpack.c.b16 %v403, %v401
    %v492 = vpack.c.b16 %v404, %v402
    %v493 = vpack.c.b16 %v407, %v405
    %v494 = vpack.c.b16 %v408, %v406
    %v495 = vpack.c.b16 %v411, %v409
    %v496 = vpack.c.b16 %v412, %v410
    %v497 = vpack.c.b16 %v415, %v413
    %v498 = vpack.c.b16 %v416, %v414
    %v499 = vpack.c.b16 %v419, %v417
    %v500 = vpack.c.b16 %v420, %v418
    %581 = vmatprep.subr.bf16.mxu0 %v422
    %582 = vmatpush1.bf16.msra.mxu0 %v421
    %583 = vmatprep.subr.bf16.mxu0 %v424
    %584 = vmatpush1.bf16.msra.mxu0 %v423
    %585 = vmatprep.subr.bf16.mxu0 %v426
    %586 = vmatpush1.bf16.msra.mxu0 %v425
    %587 = vmatprep.subr.bf16.mxu0 %v428
    %588 = vmatpush1.bf16.msra.mxu0 %v427
    %589 = vmatprep.subr.bf16.mxu0 %v430
    %590 = vmatpush1.bf16.msra.mxu0 %v429
    %591 = vmatprep.subr.bf16.mxu0 %v432
    %592 = vmatpush1.bf16.msra.mxu0 %v431
    %593 = vmatprep.subr.bf16.mxu0 %v434
    %594 = vmatpush1.bf16.msra.mxu0 %v433
    %595 = vmatprep.subr.bf16.mxu0 %v436
    %596 = vmatpush1.bf16.msra.mxu0 %v435
    %597 = vmatprep.subr.bf16.mxu0 %v438
    %598 = vmatpush1.bf16.msra.mxu0 %v437
    %599 = vmatprep.subr.bf16.mxu0 %v440
    %600 = vmatpush1.bf16.msra.mxu0 %v439
    %601 = vmatprep.subr.bf16.mxu0 %v442
    %602 = vmatpush1.bf16.msra.mxu0 %v441
    %603 = vmatprep.subr.bf16.mxu0 %v444
    %604 = vmatpush1.bf16.msra.mxu0 %v443
    %605 = vmatprep.subr.bf16.mxu0 %v446
    %606 = vmatpush1.bf16.msra.mxu0 %v445
    %607 = vmatprep.subr.bf16.mxu0 %v448
    %608 = vmatpush1.bf16.msra.mxu0 %v447
    %609 = vmatprep.subr.bf16.mxu0 %v450
    %610 = vmatpush1.bf16.msra.mxu0 %v449
    %611 = vmatprep.subr.bf16.mxu0 %v452
    %612 = vmatpush1.bf16.msra.mxu0 %v451
    %613 = vmatprep.mubr.bf16.mxu0 %v172
    %614 = vmatmul.mubr.bf16.gmra.mrb[0].mxu0 %v171
    %v615 = vpop.f32.mrb[0].mxu0
    %v616 = vadd.f32 0.0, %v615
    %v617 = vpop.f32.mrb[0].mxu0
    %v618 = vadd.f32 0.0, %v617
    %v619 = vpop.f32.mrb[0].mxu0
    %v620 = vpop.f32.mrb[0].mxu0
    %621 = vdwg.mxu0
    %622 = vmatprep.subr.bf16.mxu0 %v454
    %623 = vmatpush1.bf16.msra.mxu0 %v453
    %624 = vmatprep.subr.bf16.mxu0 %v456
    %625 = vmatpush1.bf16.msra.mxu0 %v455
    %626 = vmatprep.subr.bf16.mxu0 %v458
    %627 = vmatpush1.bf16.msra.mxu0 %v457
    %628 = vmatprep.subr.bf16.mxu0 %v460
    %629 = vmatpush1.bf16.msra.mxu0 %v459
    %630 = vmatprep.subr.bf16.mxu0 %v462
    %631 = vmatpush1.bf16.msra.mxu0 %v461
    %632 = vmatprep.subr.bf16.mxu0 %v464
    %633 = vmatpush1.bf16.msra.mxu0 %v463
    %634 = vmatprep.subr.bf16.mxu0 %v466
    %635 = vmatpush1.bf16.msra.mxu0 %v465
    %636 = vmatprep.subr.bf16.mxu0 %v468
    %637 = vmatpush1.bf16.msra.mxu0 %v467
    %638 = vmatprep.subr.bf16.mxu0 %v470
    %639 = vmatpush1.bf16.msra.mxu0 %v469
    %640 = vmatprep.subr.bf16.mxu0 %v472
    %641 = vmatpush1.bf16.msra.mxu0 %v471
    %642 = vmatprep.subr.bf16.mxu0 %v474
    %643 = vmatpush1.bf16.msra.mxu0 %v473
    %644 = vmatprep.subr.bf16.mxu0 %v476
    %645 = vmatpush1.bf16.msra.mxu0 %v475
    %646 = vmatprep.subr.bf16.mxu0 %v478
    %647 = vmatpush1.bf16.msra.mxu0 %v477
    %648 = vmatprep.subr.bf16.mxu0 %v480
    %649 = vmatpush1.bf16.msra.mxu0 %v479
    %650 = vmatprep.subr.bf16.mxu0 %v482
    %651 = vmatpush1.bf16.msra.mxu0 %v481
    %652 = vmatprep.subr.bf16.mxu0 %v484
    %653 = vmatpush1.bf16.msra.mxu0 %v483
    %654 = vmatprep.mubr.bf16.mxu0 %v174
    %655 = vmatmul.mubr.bf16.gmra.mrb[0].mxu0 %v173
    %v656 = vpop.f32.mrb[0].mxu0
    %v657 = vadd.f32 %v616, %v656
    %v658 = vpop.f32.mrb[0].mxu0
    %v659 = vadd.f32 %v618, %v658
    %v660 = vpop.f32.mrb[0].mxu0
    %v661 = vpop.f32.mrb[0].mxu0
    %662 = vdwg.mxu0
    %663 = vmatprep.subr.bf16.mxu0 %v486
    %664 = vmatpush1.bf16.msra.mxu0 %v485
    %665 = vmatprep.subr.bf16.mxu0 %v488
    %666 = vmatpush1.bf16.msra.mxu0 %v487
    %667 = vmatprep.subr.bf16.mxu0 %v490
    %668 = vmatpush1.bf16.msra.mxu0 %v489
    %669 = vmatprep.subr.bf16.mxu0 %v492
    %670 = vmatpush1.bf16.msra.mxu0 %v491
    %671 = vmatprep.subr.bf16.mxu0 %v494
    %672 = vmatpush1.bf16.msra.mxu0 %v493
    %673 = vmatprep.subr.bf16.mxu0 %v496
    %674 = vmatpush1.bf16.msra.mxu0 %v495
    %675 = vmatprep.subr.bf16.mxu0 %v498
    %676 = vmatpush1.bf16.msra.mxu0 %v497
    %677 = vmatprep.subr.bf16.mxu0 %v500
    %678 = vmatpush1.bf16.msra.mxu0 %v499
    %679 = vmatprep.subr.bf16.mxu0 0
    %680 = vmatpush1.bf16.msra.mxu0 0
    %681 = vmatprep.subr.bf16.mxu0 0
    %682 = vmatpush1.bf16.msra.mxu0 0
    %683 = vmatprep.subr.bf16.mxu0 0
    %684 = vmatpush1.bf16.msra.mxu0 0
    %685 = vmatprep.subr.bf16.mxu0 0
    %686 = vmatpush1.bf16.msra.mxu0 0
    %687 = vmatprep.subr.bf16.mxu0 0
    %688 = vmatpush1.bf16.msra.mxu0 0
    %689 = vmatprep.subr.bf16.mxu0 0
    %690 = vmatpush1.bf16.msra.mxu0 0
    %691 = vmatprep.subr.bf16.mxu0 0
    %692 = vmatpush1.bf16.msra.mxu0 0
    %693 = vmatprep.subr.bf16.mxu0 0
    %694 = vmatpush1.bf16.msra.mxu0 0
    %695 = vmatprep.mubr.bf16.mxu0 0
    %696 = vmatmul.mubr.bf16.gmra.mrb[0].mxu0 %v175
    %v697 = vpop.f32.mrb[0].mxu0
    %v698 = vadd.f32 %v657, %v697
    %v699 = vpop.f32.mrb[0].mxu0
    %v700 = vadd.f32 %v659, %v699
    %v701 = vpop.f32.mrb[0].mxu0
    %v702 = vpop.f32.mrb[0].mxu0
    %703 = vdwg.mxu0
    %v704 = vrot.slane %v698, 4
    %v705 = vadd.f32 %v698, %v704
    %v706 = vrot.slane %v705, 2
    %v707 = vadd.f32 %v705, %v706
    %v708 = vrot.slane %v707, 1
    %v709 = vadd.f32 %v707, %v708
    %v710 = vrot.slane %v700, 4
    %v711 = vadd.f32 %v700, %v710
    %v712 = vrot.slane %v711, 2
    %v713 = vadd.f32 %v711, %v712
    %v714 = vrot.slane %v713, 1
    %v715 = vadd.f32 %v713, %v714
    %v716 = vrcp.pop 8.0
    %v717 = vmul.f32 %v709, %v716
    %v718 = vmul.f32 %v715, %v716
    %v719 = vmul.f32 %v698, %v698
    %v720 = vmul.f32 %v700, %v700
    %v721 = vrot.slane %v719, 4
    %v722 = vadd.f32 %v719, %v721
    %v723 = vrot.slane %v722, 2
    %v724 = vadd.f32 %v722, %v723
    %v725 = vrot.slane %v724, 1
    %v726 = vadd.f32 %v724, %v725
    %v727 = vrot.slane %v720, 4
    %v728 = vadd.f32 %v720, %v727
    %v729 = vrot.slane %v728, 2
    %v730 = vadd.f32 %v728, %v729
    %v731 = vrot.slane %v730, 1
    %v732 = vadd.f32 %v730, %v731
    %v733 = vmul.f32 %v726, %v716
    %v734 = vmul.f32 %v732, %v716
    %v735 = vmul.f32 %v717, %v717
    %v736 = vmul.f32 %v718, %v718
    %v737 = vsub.f32 %v733, %v735
    %v738 = vsub.f32 %v734, %v736
    %v739 = vadd.f32 %v737, 1e-05
    %v740 = vadd.f32 %v738, 1e-05
    %v741 = vrsqrt.pop %v739
    %v742 = vrsqrt.pop %v740
    %v743 = vmul.f32 %v76, %v741
    %v744 = vmul.f32 %v77, %v742
    %v745 = vmul.f32 %v717, %v743
    %v746 = vmul.f32 %v718, %v744
    %v749 = vrot.slane %v745, 7
    %v750 = vrot.slane %v746, 7
    %v753 = vsub.f32 %v76, %v749
    %v754 = vsub.f32 %v77, %v750
    %v755 = vlaneseq
    %v756 = vshrl.u32 %v755, 7
    %v757 = vsub.s32 0, %v756
    %v758 = vrot.slane %v743, %v757
    %v759 = vlaneseq
    %v760 = vshrl.u32 %v759, 7
    %v761 = vsub.s32 0, %v760
    %v762 = vrot.slane %v744, %v761
    %v763 = vmul.f32 %v698, %v758
    %v764 = vmul.f32 %v700, %v762
    %v765 = vlaneseq
    %v766 = vshrl.u32 %v765, 7
    %v767 = vsub.s32 1, %v766
    %v768 = vrot.slane %v753, %v767
    %v769 = vlaneseq
    %v770 = vshrl.u32 %v769, 7
    %v771 = vsub.s32 1, %v770
    %v772 = vrot.slane %v754, %v771
    %v773 = vadd.f32 %v763, %v768
    %v774 = vadd.f32 %v764, %v772
    %v775 = vmax.f32 %v773, 0.0
    %v776 = vmax.f32 %v774, 0.0
    %v777 = vpack.c.bf16 %v775, %v775
    %v778 = vpack.c.bf16 %v776, %v776
    %v779 = vld [vmem:[%s2] sm:$0xf]
    %v780 = vld [vmem:[%s2 + $0x4] sm:$0xf]
    %v781 = vld [vmem:[%s2 + $0x8] sm:$0xf]
    %v782 = vld [vmem:[%s2 + $0xc] sm:$0xf]
    %v783 = vld [vmem:[%s2 + $0x10] sm:$0xf]
    %v784 = vld [vmem:[%s2 + $0x14] sm:$0xf]
    %v785 = vld [vmem:[%s2 + $0x18] sm:$0xf]
    %v786 = vld [vmem:[%s2 + $0x1c] sm:$0xf]
    %v787 = vld [vmem:[%s2 + $0x20] sm:$0xf]
    %v788 = vld [vmem:[%s2 + $0x24] sm:$0xf]
    %v789 = vld [vmem:[%s2 + $0x28] sm:$0xf]
    %v790 = vld [vmem:[%s2 + $0x2c] sm:$0xf]
    %v791 = vld [vmem:[%s2 + $0x30] sm:$0xf]
    %v792 = vld [vmem:[%s2 + $0x34] sm:$0xf]
    %v793 = vld [vmem:[%s2 + $0x38] sm:$0xf]
    %v794 = vld [vmem:[%s2 + $0x3c] sm:$0xf]
    %v795 = vld [vmem:[%s2 + $0x40] sm:$0xf]
    %v796 = vld [vmem:[%s2 + $0x44] sm:$0xf]
    %v797 = vld [vmem:[%s2 + $0x48] sm:$0xf]
    %v798 = vld [vmem:[%s2 + $0x4c] sm:$0xf]
    %v799 = vld [vmem:[%s2 + $0x50] sm:$0xf]
    %v800 = vld [vmem:[%s2 + $0x54] sm:$0xf]
    %v801 = vld [vmem:[%s2 + $0x58] sm:$0xf]
    %v802 = vld [vmem:[%s2 + $0x5c] sm:$0xf]
    %v803 = vld [vmem:[%s2 + $0x60] sm:$0xf]
    %v804 = vld [vmem:[%s2 + $0x64] sm:$0xf]
    %v805 = vld [vmem:[%s2 + $0x68] sm:$0xf]
    %v806 = vld [vmem:[%s2 + $0x6c] sm:$0xf]
    %v807 = vld [vmem:[%s2 + $0x70] sm:$0xf]
    %v808 = vld [vmem:[%s2 + $0x74] sm:$0xf]
    %v809 = vld [vmem:[%s2 + $0x78] sm:$0xf]
    %v810 = vld [vmem:[%s2 + $0x7c] sm:$0xf]
    %v843 = vunpack.c.l.b16 %v779
    %v844 = vunpack.c.l.b16 %v780
    %v845 = vunpack.c.l.b16 %v781
    %v846 = vunpack.c.l.b16 %v782
    %v847 = vunpack.c.l.b16 %v783
    %v848 = vunpack.c.l.b16 %v784
    %v849 = vunpack.c.l.b16 %v785
    %v850 = vunpack.c.l.b16 %v786
    %v851 = vunpack.c.l.b16 %v787
    %v852 = vunpack.c.l.b16 %v788
    %v853 = vunpack.c.l.b16 %v789
    %v854 = vunpack.c.l.b16 %v790
    %v855 = vunpack.c.l.b16 %v791
    %v856 = vunpack.c.l.b16 %v792
    %v857 = vunpack.c.l.b16 %v793
    %v858 = vunpack.c.l.b16 %v794
    %v859 = vunpack.c.l.b16 %v795
    %v860 = vunpack.c.l.b16 %v796
    %v861 = vunpack.c.l.b16 %v797
    %v862 = vunpack.c.l.b16 %v798
    %v863 = vunpack.c.l.b16 %v799
    %v864 = vunpack.c.l.b16 %v800
    %v865 = vunpack.c.l.b16 %v801
    %v866 = vunpack.c.l.b16 %v802
    %v867 = vunpack.c.l.b16 %v803
    %v868 = vunpack.c.l.b16 %v804
    %v869 = vunpack.c.l.b16 %v805
    %v870 = vunpack.c.l.b16 %v806
    %v871 = vunpack.c.l.b16 %v807
    %v872 = vunpack.c.l.b16 %v808
    %v873 = vunpack.c.l.b16 %v809
    %v874 = vunpack.c.l.b16 %v810
    %v875 = vpack.c.b16 %v844, %v843
    %v876 = vpack.c.b16 %v846, %v845
    %v877 = vpack.c.b16 %v848, %v847
    %v878 = vpack.c.b16 %v850, %v849
    %v879 = vpack.c.b16 %v852, %v851
    %v880 = vpack.c.b16 %v854, %v853
    %v881 = vpack.c.b16 %v856, %v855
    %v882 = vpack.c.b16 %v858, %v857
    %v883 = vpack.c.b16 %v860, %v859
    %v884 = vpack.c.b16 %v862, %v861
    %v885 = vpack.c.b16 %v864, %v863
    %v886 = vpack.c.b16 %v866, %v865
    %v887 = vpack.c.b16 %v868, %v867
    %v888 = vpack.c.b16 %v870, %v869
    %v889 = vpack.c.b16 %v872, %v871
    %v890 = vpack.c.b16 %v874, %v873
    %907 = vmatprep.subr.bf16.mxu0 0
    %908 = vmatpush1.bf16.msra.mxu0 %v875
    %909 = vmatprep.subr.bf16.mxu0 0
    %910 = vmatpush1.bf16.msra.mxu0 %v876
    %911 = vmatprep.subr.bf16.mxu0 0
    %912 = vmatpush1.bf16.msra.mxu0 %v877
    %913 = vmatprep.subr.bf16.mxu0 0
    %914 = vmatpush1.bf16.msra.mxu0 %v878
    %915 = vmatprep.subr.bf16.mxu0 0
    %916 = vmatpush1.bf16.msra.mxu0 %v879
    %917 = vmatprep.subr.bf16.mxu0 0
    %918 = vmatpush1.bf16.msra.mxu0 %v880
    %919 = vmatprep.subr.bf16.mxu0 0
    %920 = vmatpush1.bf16.msra.mxu0 %v881
    %921 = vmatprep.subr.bf16.mxu0 0
    %922 = vmatpush1.bf16.msra.mxu0 %v882
    %923 = vmatprep.subr.bf16.mxu0 0
    %924 = vmatpush1.bf16.msra.mxu0 %v883
    %925 = vmatprep.subr.bf16.mxu0 0
    %926 = vmatpush1.bf16.msra.mxu0 %v884
    %927 = vmatprep.subr.bf16.mxu0 0
    %928 = vmatpush1.bf16.msra.mxu0 %v885
    %929 = vmatprep.subr.bf16.mxu0 0
    %930 = vmatpush1.bf16.msra.mxu0 %v886
    %931 = vmatprep.subr.bf16.mxu0 0
    %932 = vmatpush1.bf16.msra.mxu0 %v887
    %933 = vmatprep.subr.bf16.mxu0 0
    %934 = vmatpush1.bf16.msra.mxu0 %v888
    %935 = vmatprep.subr.bf16.mxu0 0
    %936 = vmatpush1.bf16.msra.mxu0 %v889
    %937 = vmatprep.subr.bf16.mxu0 0
    %938 = vmatpush1.bf16.msra.mxu0 %v890
    %939 = vmatprep.mubr.bf16.mxu0 %v778
    %940 = vmatmul.mubr.bf16.gmra.mrb[0].mxu0 %v777
    %v941 = vpop.f32.mrb[0].mxu0
    %v942 = vadd.f32 0.0, %v941
    %v943 = vpop.f32.mrb[0].mxu0
    %v944 = vpop.f32.mrb[0].mxu0
    %v945 = vpop.f32.mrb[0].mxu0
    %946 = vdwg.mxu0
    %v947 = vrot.slane %v942, 4
    %v948 = vadd.f32 %v942, %v947
    %v949 = vrot.slane %v948, 2
    %v950 = vadd.f32 %v948, %v949
    %v951 = vrot.slane %v950, 1
    %v952 = vadd.f32 %v950, %v951
    %v953 = vmul.f32 %v952, %v716
    %v954 = vmul.f32 %v942, %v942
    %v955 = vrot.slane %v954, 4
    %v956 = vadd.f32 %v954, %v955
    %v957 = vrot.slane %v956, 2
    %v958 = vadd.f32 %v956, %v957
    %v959 = vrot.slane %v958, 1
    %v960 = vadd.f32 %v958, %v959
    %v961 = vmul.f32 %v960, %v716
    %v962 = vmul.f32 %v953, %v953
    %v963 = vsub.f32 %v961, %v962
    %v964 = vadd.f32 %v963, 1e-05
    %v965 = vrsqrt.pop %v964
    %v966 = vmul.f32 %v76, %v965
    %v967 = vmul.f32 %v953, %v966
    %v969 = vrot.slane %v967, 7
    %v971 = vsub.f32 %v76, %v969
    %v972 = vlaneseq
    %v973 = vshrl.u32 %v972, 7
    %v974 = vsub.s32 2, %v973
    %v975 = vrot.slane %v966, %v974
    %v976 = vmul.f32 %v942, %v975
    %v977 = vlaneseq
    %v978 = vshrl.u32 %v977, 7
    %v979 = vsub.s32 3, %v978
    %v980 = vrot.slane %v971, %v979
    %v981 = vadd.f32 %v976, %v980
    %v982 = vmax.f32 %v981, 0.0
    %v983 = vpack.c.bf16 %v982, %v982
    %v984 = vld [vmem:[#allocation5] sm:$0xf]
    %v985 = vld [vmem:[#allocation5 + $0x4] sm:$0xf]
    %v986 = vld [vmem:[#allocation5 + $0x8] sm:$0xf]
    %v987 = vld [vmem:[#allocation5 + $0xc] sm:$0xf]
    %v988 = vld [vmem:[#allocation5 + $0x10] sm:$0xf]
    %v989 = vld [vmem:[#allocation5 + $0x14] sm:$0xf]
    %v990 = vld [vmem:[#allocation5 + $0x18] sm:$0xf]
    %v991 = vld [vmem:[#allocation5 + $0x1c] sm:$0xf]
    %v992 = vld [vmem:[#allocation5 + $0x20] sm:$0xf]
    %v993 = vld [vmem:[#allocation5 + $0x24] sm:$0xf]
    %v994 = vld [vmem:[#allocation5 + $0x28] sm:$0xf]
    %v995 = vld [vmem:[#allocation5 + $0x2c] sm:$0xf]
    %v996 = vld [vmem:[#allocation5 + $0x30] sm:$0xf]
    %v997 = vld [vmem:[#allocation5 + $0x34] sm:$0xf]
    %v998 = vld [vmem:[#allocation5 + $0x38] sm:$0xf]
    %v999 = vld [vmem:[#allocation5 + $0x3c] sm:$0xf]
    %v1016 = vunpack.c.l.b16 %v984
    %v1017 = vunpack.c.l.b16 %v985
    %v1018 = vunpack.c.l.b16 %v986
    %v1019 = vunpack.c.l.b16 %v987
    %v1020 = vunpack.c.l.b16 %v988
    %v1021 = vunpack.c.l.b16 %v989
    %v1022 = vunpack.c.l.b16 %v990
    %v1023 = vunpack.c.l.b16 %v991
    %v1024 = vunpack.c.l.b16 %v992
    %v1025 = vunpack.c.l.b16 %v993
    %v1026 = vunpack.c.l.b16 %v994
    %v1027 = vunpack.c.l.b16 %v995
    %v1028 = vunpack.c.l.b16 %v996
    %v1029 = vunpack.c.l.b16 %v997
    %v1030 = vunpack.c.l.b16 %v998
    %v1031 = vunpack.c.l.b16 %v999
    %v1032 = vpack.c.b16 %v1017, %v1016
    %v1033 = vpack.c.b16 %v1019, %v1018
    %v1034 = vpack.c.b16 %v1021, %v1020
    %v1035 = vpack.c.b16 %v1023, %v1022
    %v1036 = vpack.c.b16 %v1025, %v1024
    %v1037 = vpack.c.b16 %v1027, %v1026
    %v1038 = vpack.c.b16 %v1029, %v1028
    %v1039 = vpack.c.b16 %v1031, %v1030
    %1048 = vmatprep.subr.bf16.mxu0 0
    %1049 = vmatpush1.bf16.msra.mxu0 %v1032
    %1050 = vmatprep.subr.bf16.mxu0 0
    %1051 = vmatpush1.bf16.msra.mxu0 %v1033
    %1052 = vmatprep.subr.bf16.mxu0 0
    %1053 = vmatpush1.bf16.msra.mxu0 %v1034
    %1054 = vmatprep.subr.bf16.mxu0 0
    %1055 = vmatpush1.bf16.msra.mxu0 %v1035
    %1056 = vmatprep.subr.bf16.mxu0 0
    %1057 = vmatpush1.bf16.msra.mxu0 %v1036
    %1058 = vmatprep.subr.bf16.mxu0 0
    %1059 = vmatpush1.bf16.msra.mxu0 %v1037
    %1060 = vmatprep.subr.bf16.mxu0 0
    %1061 = vmatpush1.bf16.msra.mxu0 %v1038
    %1062 = vmatprep.subr.bf16.mxu0 0
    %1063 = vmatpush1.bf16.msra.mxu0 %v1039
    %1064 = vmatprep.subr.bf16.mxu0 0
    %1065 = vmatpush1.bf16.msra.mxu0 0
    %1066 = vmatprep.subr.bf16.mxu0 0
    %1067 = vmatpush1.bf16.msra.mxu0 0
    %1068 = vmatprep.subr.bf16.mxu0 0
    %1069 = vmatpush1.bf16.msra.mxu0 0
    %1070 = vmatprep.subr.bf16.mxu0 0
    %1071 = vmatpush1.bf16.msra.mxu0 0
    %1072 = vmatprep.subr.bf16.mxu0 0
    %1073 = vmatpush1.bf16.msra.mxu0 0
    %1074 = vmatprep.subr.bf16.mxu0 0
    %1075 = vmatpush1.bf16.msra.mxu0 0
    %1076 = vmatprep.subr.bf16.mxu0 0
    %1077 = vmatpush1.bf16.msra.mxu0 0
    %1078 = vmatprep.subr.bf16.mxu0 0
    %1079 = vmatpush1.bf16.msra.mxu0 0
    %1080 = vmatprep.mubr.bf16.mxu0 0
    %1081 = vmatmul.mubr.bf16.gmra.mrb[0].mxu0 %v983
    %v1082 = vpop.f32.mrb[0].mxu0
    %v1083 = vadd.f32 0.0, %v1082
    %v1084 = vpop.f32.mrb[0].mxu0
    %v1085 = vpop.f32.mrb[0].mxu0
    %v1086 = vpop.f32.mrb[0].mxu0
    %1087 = vdwg.mxu0
    %v1088 = vrot.slane %v1083, 4
    %v1089 = vadd.f32 %v1083, %v1088
    %v1090 = vrot.slane %v1089, 2
    %v1091 = vadd.f32 %v1089, %v1090
    %v1092 = vrot.slane %v1091, 1
    %v1093 = vadd.f32 %v1091, %v1092
    %v1094 = vmul.f32 %v1093, %v716
    %v1095 = vmul.f32 %v1083, %v1083
    %v1096 = vrot.slane %v1095, 4
    %v1097 = vadd.f32 %v1095, %v1096
    %v1098 = vrot.slane %v1097, 2
    %v1099 = vadd.f32 %v1097, %v1098
    %v1100 = vrot.slane %v1099, 1
    %v1101 = vadd.f32 %v1099, %v1100
    %v1102 = vmul.f32 %v1101, %v716
    %v1103 = vmul.f32 %v1094, %v1094
    %v1104 = vsub.f32 %v1102, %v1103
    %v1105 = vadd.f32 %v1104, 1e-05
    %v1106 = vrsqrt.pop %v1105
    %v1107 = vmul.f32 %v76, %v1106
    %v1108 = vmul.f32 %v1094, %v1107
    %v1110 = vrot.slane %v1108, 7
    %v1112 = vsub.f32 %v76, %v1110
    %v1113 = vlaneseq
    %v1114 = vshrl.u32 %v1113, 7
    %v1115 = vsub.s32 4, %v1114
    %v1116 = vrot.slane %v1107, %v1115
    %v1117 = vmul.f32 %v1083, %v1116
    %v1118 = vlaneseq
    %v1119 = vshrl.u32 %v1118, 7
    %v1120 = vsub.s32 5, %v1119
    %v1121 = vrot.slane %v1112, %v1120
    %v1122 = vadd.f32 %v1117, %v1121
    %v1123 = vmax.f32 %v1122, 0.0
    %v1124 = vpack.c.bf16 %v1123, %v1123
    %v1125 = vld [vmem:[#allocation7] sm:$0xf]
    %v1126 = vld [vmem:[#allocation7 + $0x4] sm:$0xf]
    %v1127 = vld [vmem:[#allocation7 + $0x8] sm:$0xf]
    %v1128 = vld [vmem:[#allocation7 + $0xc] sm:$0xf]
    %v1129 = vld [vmem:[#allocation7 + $0x10] sm:$0xf]
    %v1130 = vld [vmem:[#allocation7 + $0x14] sm:$0xf]
    %v1131 = vld [vmem:[#allocation7 + $0x18] sm:$0xf]
    %v1132 = vld [vmem:[#allocation7 + $0x1c] sm:$0xf]
    %v1133 = vld [vmem:[#allocation7 + $0x20] sm:$0xf]
    %v1134 = vld [vmem:[#allocation7 + $0x24] sm:$0xf]
    %v1135 = vld [vmem:[#allocation7 + $0x28] sm:$0xf]
    %v1136 = vld [vmem:[#allocation7 + $0x2c] sm:$0xf]
    %v1137 = vld [vmem:[#allocation7 + $0x30] sm:$0xf]
    %v1138 = vld [vmem:[#allocation7 + $0x34] sm:$0xf]
    %v1139 = vld [vmem:[#allocation7 + $0x38] sm:$0xf]
    %v1140 = vld [vmem:[#allocation7 + $0x3c] sm:$0xf]
    %v1157 = vunpack.c.l.b16 %v1125
    %v1158 = vunpack.c.l.b16 %v1126
    %v1159 = vunpack.c.l.b16 %v1127
    %v1160 = vunpack.c.l.b16 %v1128
    %v1161 = vunpack.c.l.b16 %v1129
    %v1162 = vunpack.c.l.b16 %v1130
    %v1163 = vunpack.c.l.b16 %v1131
    %v1164 = vunpack.c.l.b16 %v1132
    %v1165 = vunpack.c.l.b16 %v1133
    %v1166 = vunpack.c.l.b16 %v1134
    %v1167 = vunpack.c.l.b16 %v1135
    %v1168 = vunpack.c.l.b16 %v1136
    %v1169 = vunpack.c.l.b16 %v1137
    %v1170 = vunpack.c.l.b16 %v1138
    %v1171 = vunpack.c.l.b16 %v1139
    %v1172 = vunpack.c.l.b16 %v1140
    %v1173 = vpack.c.b16 %v1158, %v1157
    %v1174 = vpack.c.b16 %v1160, %v1159
    %v1175 = vpack.c.b16 %v1162, %v1161
    %v1176 = vpack.c.b16 %v1164, %v1163
    %v1177 = vpack.c.b16 %v1166, %v1165
    %v1178 = vpack.c.b16 %v1168, %v1167
    %v1179 = vpack.c.b16 %v1170, %v1169
    %v1180 = vpack.c.b16 %v1172, %v1171
    %1189 = vmatprep.subr.bf16.mxu0 0
    %1190 = vmatpush1.bf16.msra.mxu0 %v1173
    %1191 = vmatprep.subr.bf16.mxu0 0
    %1192 = vmatpush1.bf16.msra.mxu0 %v1174
    %1193 = vmatprep.subr.bf16.mxu0 0
    %1194 = vmatpush1.bf16.msra.mxu0 %v1175
    %1195 = vmatprep.subr.bf16.mxu0 0
    %1196 = vmatpush1.bf16.msra.mxu0 %v1176
    %1197 = vmatprep.subr.bf16.mxu0 0
    %1198 = vmatpush1.bf16.msra.mxu0 %v1177
    %1199 = vmatprep.subr.bf16.mxu0 0
    %1200 = vmatpush1.bf16.msra.mxu0 %v1178
    %1201 = vmatprep.subr.bf16.mxu0 0
    %1202 = vmatpush1.bf16.msra.mxu0 %v1179
    %1203 = vmatprep.subr.bf16.mxu0 0
    %1204 = vmatpush1.bf16.msra.mxu0 %v1180
    %1205 = vmatprep.subr.bf16.mxu0 0
    %1206 = vmatpush1.bf16.msra.mxu0 0
    %1207 = vmatprep.subr.bf16.mxu0 0
    %1208 = vmatpush1.bf16.msra.mxu0 0
    %1209 = vmatprep.subr.bf16.mxu0 0
    %1210 = vmatpush1.bf16.msra.mxu0 0
    %1211 = vmatprep.subr.bf16.mxu0 0
    %1212 = vmatpush1.bf16.msra.mxu0 0
    %1213 = vmatprep.subr.bf16.mxu0 0
    %1214 = vmatpush1.bf16.msra.mxu0 0
    %1215 = vmatprep.subr.bf16.mxu0 0
    %1216 = vmatpush1.bf16.msra.mxu0 0
    %1217 = vmatprep.subr.bf16.mxu0 0
    %1218 = vmatpush1.bf16.msra.mxu0 0
    %1219 = vmatprep.subr.bf16.mxu0 0
    %1220 = vmatpush1.bf16.msra.mxu0 0
    %1221 = vmatprep.mubr.bf16.mxu0 0
    %1222 = vmatmul.mubr.bf16.gmra.mrb[0].mxu0 %v1124
    %v1223 = vpop.f32.mrb[0].mxu0
    %v1224 = vadd.f32 0.0, %v1223
    %v1225 = vpop.f32.mrb[0].mxu0
    %v1226 = vpop.f32.mrb[0].mxu0
    %v1227 = vpop.f32.mrb[0].mxu0
    %1228 = vdwg.mxu0
    %v1229 = vrot.slane %v1224, 4
    %v1230 = vadd.f32 %v1224, %v1229
    %v1231 = vrot.slane %v1230, 2
    %v1232 = vadd.f32 %v1230, %v1231
    %v1233 = vrot.slane %v1232, 1
    %v1234 = vadd.f32 %v1232, %v1233
    %v1235 = vmul.f32 %v1234, %v716
    %v1236 = vmul.f32 %v1224, %v1224
    %v1237 = vrot.slane %v1236, 4
    %v1238 = vadd.f32 %v1236, %v1237
    %v1239 = vrot.slane %v1238, 2
    %v1240 = vadd.f32 %v1238, %v1239
    %v1241 = vrot.slane %v1240, 1
    %v1242 = vadd.f32 %v1240, %v1241
    %v1243 = vmul.f32 %v1242, %v716
    %v1244 = vmul.f32 %v1235, %v1235
    %v1245 = vsub.f32 %v1243, %v1244
    %v1246 = vadd.f32 %v1245, 1e-05
    %v1247 = vrsqrt.pop %v1246
    %v1248 = vmul.f32 %v76, %v1247
    %v1249 = vmul.f32 %v1235, %v1248
    %v1251 = vrot.slane %v1249, 7
    %v1253 = vsub.f32 %v76, %v1251
    %v1254 = vlaneseq
    %v1255 = vshrl.u32 %v1254, 7
    %v1256 = vsub.s32 6, %v1255
    %v1257 = vrot.slane %v1248, %v1256
    %v1258 = vmul.f32 %v1224, %v1257
    %v1259 = vlaneseq
    %v1260 = vshrl.u32 %v1259, 7
    %v1261 = vsub.s32 7, %v1260
    %v1262 = vrot.slane %v1253, %v1261
    %v1263 = vadd.f32 %v1258, %v1262
    %v1264 = vmax.f32 %v1263, 0.0
    %v1265 = vpack.c.bf16 %v1264, %v1264
    %v1266 = vld [vmem:[%s5] sm:$0xff]
    %v1267 = vld [vmem:[%s5 + $0x8] sm:$0xff]
    %v1268 = vld [vmem:[%s5 + $0x10] sm:$0xff]
    %v1269 = vld [vmem:[%s5 + $0x18] sm:$0xff]
    %v1270 = vld [vmem:[%s5 + $0x20] sm:$0xff]
    %v1271 = vld [vmem:[%s5 + $0x28] sm:$0xff]
    %v1272 = vld [vmem:[%s5 + $0x30] sm:$0xff]
    %v1273 = vld [vmem:[%s5 + $0x38] sm:$0xff]
    %v1274 = vld [vmem:[%s5 + $0x40] sm:$0xff]
    %v1275 = vld [vmem:[%s5 + $0x48] sm:$0xff]
    %v1276 = vld [vmem:[%s5 + $0x50] sm:$0xff]
    %v1277 = vld [vmem:[%s5 + $0x58] sm:$0xff]
    %v1278 = vld [vmem:[%s5 + $0x60] sm:$0xff]
    %v1279 = vld [vmem:[%s5 + $0x68] sm:$0xff]
    %v1280 = vld [vmem:[%s5 + $0x70] sm:$0xff]
    %v1281 = vld [vmem:[%s5 + $0x78] sm:$0xff]
    %v1298 = vunpack.c.l.b16 %v1266
    %v1299 = vunpack.c.h.b16 %v1266
    %v1300 = vunpack.c.l.b16 %v1267
    %v1301 = vunpack.c.h.b16 %v1267
    %v1302 = vunpack.c.l.b16 %v1268
    %v1303 = vunpack.c.h.b16 %v1268
    %v1304 = vunpack.c.l.b16 %v1269
    %v1305 = vunpack.c.h.b16 %v1269
    %v1306 = vunpack.c.l.b16 %v1270
    %v1307 = vunpack.c.h.b16 %v1270
    %v1308 = vunpack.c.l.b16 %v1271
    %v1309 = vunpack.c.h.b16 %v1271
    %v1310 = vunpack.c.l.b16 %v1272
    %v1311 = vunpack.c.h.b16 %v1272
    %v1312 = vunpack.c.l.b16 %v1273
    %v1313 = vunpack.c.h.b16 %v1273
    %v1314 = vunpack.c.l.b16 %v1274
    %v1315 = vunpack.c.h.b16 %v1274
    %v1316 = vunpack.c.l.b16 %v1275
    %v1317 = vunpack.c.h.b16 %v1275
    %v1318 = vunpack.c.l.b16 %v1276
    %v1319 = vunpack.c.h.b16 %v1276
    %v1320 = vunpack.c.l.b16 %v1277
    %v1321 = vunpack.c.h.b16 %v1277
    %v1322 = vunpack.c.l.b16 %v1278
    %v1323 = vunpack.c.h.b16 %v1278
    %v1324 = vunpack.c.l.b16 %v1279
    %v1325 = vunpack.c.h.b16 %v1279
    %v1326 = vunpack.c.l.b16 %v1280
    %v1327 = vunpack.c.h.b16 %v1280
    %v1328 = vunpack.c.l.b16 %v1281
    %v1329 = vunpack.c.h.b16 %v1281
    %v1330 = vpack.c.b16 %v1300, %v1298
    %v1331 = vpack.c.b16 %v1301, %v1299
    %v1332 = vpack.c.b16 %v1304, %v1302
    %v1333 = vpack.c.b16 %v1305, %v1303
    %v1334 = vpack.c.b16 %v1308, %v1306
    %v1335 = vpack.c.b16 %v1309, %v1307
    %v1336 = vpack.c.b16 %v1312, %v1310
    %v1337 = vpack.c.b16 %v1313, %v1311
    %v1338 = vpack.c.b16 %v1316, %v1314
    %v1339 = vpack.c.b16 %v1317, %v1315
    %v1340 = vpack.c.b16 %v1320, %v1318
    %v1341 = vpack.c.b16 %v1321, %v1319
    %v1342 = vpack.c.b16 %v1324, %v1322
    %v1343 = vpack.c.b16 %v1325, %v1323
    %v1344 = vpack.c.b16 %v1328, %v1326
    %v1345 = vpack.c.b16 %v1329, %v1327
    %1362 = vmatprep.subr.bf16.mxu0 %v1331
    %1363 = vmatpush1.bf16.msra.mxu0 %v1330
    %1364 = vmatprep.subr.bf16.mxu0 %v1333
    %1365 = vmatpush1.bf16.msra.mxu0 %v1332
    %1366 = vmatprep.subr.bf16.mxu0 %v1335
    %1367 = vmatpush1.bf16.msra.mxu0 %v1334
    %1368 = vmatprep.subr.bf16.mxu0 %v1337
    %1369 = vmatpush1.bf16.msra.mxu0 %v1336
    %1370 = vmatprep.subr.bf16.mxu0 %v1339
    %1371 = vmatpush1.bf16.msra.mxu0 %v1338
    %1372 = vmatprep.subr.bf16.mxu0 %v1341
    %1373 = vmatpush1.bf16.msra.mxu0 %v1340
    %1374 = vmatprep.subr.bf16.mxu0 %v1343
    %1375 = vmatpush1.bf16.msra.mxu0 %v1342
    %1376 = vmatprep.subr.bf16.mxu0 %v1345
    %1377 = vmatpush1.bf16.msra.mxu0 %v1344
    %1378 = vmatprep.subr.bf16.mxu0 0
    %1379 = vmatpush1.bf16.msra.mxu0 0
    %1380 = vmatprep.subr.bf16.mxu0 0
    %1381 = vmatpush1.bf16.msra.mxu0 0
    %1382 = vmatprep.subr.bf16.mxu0 0
    %1383 = vmatpush1.bf16.msra.mxu0 0
    %1384 = vmatprep.subr.bf16.mxu0 0
    %1385 = vmatpush1.bf16.msra.mxu0 0
    %1386 = vmatprep.subr.bf16.mxu0 0
    %1387 = vmatpush1.bf16.msra.mxu0 0
    %1388 = vmatprep.subr.bf16.mxu0 0
    %1389 = vmatpush1.bf16.msra.mxu0 0
    %1390 = vmatprep.subr.bf16.mxu0 0
    %1391 = vmatpush1.bf16.msra.mxu0 0
    %1392 = vmatprep.subr.bf16.mxu0 0
    %1393 = vmatpush1.bf16.msra.mxu0 0
    %1394 = vmatprep.mubr.bf16.mxu0 0
    %1395 = vmatmul.mubr.bf16.gmra.mrb[0].mxu0 %v1265
    %v1396 = vpop.f32.mrb[0].mxu0
    %v1397 = vadd.f32 0.0, %v1396
    %v1398 = vpop.f32.mrb[0].mxu0
    %v1399 = vadd.f32 0.0, %v1398
    %v1400 = vpop.f32.mrb[0].mxu0
    %v1401 = vpop.f32.mrb[0].mxu0
    %1402 = vdwg.mxu0
    %v1403 = vrot.slane %v1397, 4
    %v1404 = vadd.f32 %v1397, %v1403
    %v1405 = vrot.slane %v1404, 2
    %v1406 = vadd.f32 %v1404, %v1405
    %v1407 = vrot.slane %v1406, 1
    %v1408 = vadd.f32 %v1406, %v1407
    %v1409 = vrot.slane %v1399, 4
    %v1410 = vadd.f32 %v1399, %v1409
    %v1411 = vrot.slane %v1410, 2
    %v1412 = vadd.f32 %v1410, %v1411
    %v1413 = vrot.slane %v1412, 1
    %v1414 = vadd.f32 %v1412, %v1413
    %v1415 = vmul.f32 %v1408, %v716
    %v1416 = vmul.f32 %v1414, %v716
    %v1417 = vmul.f32 %v1397, %v1397
    %v1418 = vmul.f32 %v1399, %v1399
    %v1419 = vrot.slane %v1417, 4
    %v1420 = vadd.f32 %v1417, %v1419
    %v1421 = vrot.slane %v1420, 2
    %v1422 = vadd.f32 %v1420, %v1421
    %v1423 = vrot.slane %v1422, 1
    %v1424 = vadd.f32 %v1422, %v1423
    %v1425 = vrot.slane %v1418, 4
    %v1426 = vadd.f32 %v1418, %v1425
    %v1427 = vrot.slane %v1426, 2
    %v1428 = vadd.f32 %v1426, %v1427
    %v1429 = vrot.slane %v1428, 1
    %v1430 = vadd.f32 %v1428, %v1429
    %v1431 = vmul.f32 %v1424, %v716
    %v1432 = vmul.f32 %v1430, %v716
    %v1433 = vmul.f32 %v1415, %v1415
    %v1434 = vmul.f32 %v1416, %v1416
    %v1435 = vsub.f32 %v1431, %v1433
    %v1436 = vsub.f32 %v1432, %v1434
    %v1437 = vadd.f32 %v1435, 1e-05
    %v1438 = vadd.f32 %v1436, 1e-05
    %v1439 = vrsqrt.pop %v1437
    %v1440 = vrsqrt.pop %v1438
    %v1441 = vmul.f32 %v78, %v1439
    %v1442 = vmul.f32 %v79, %v1440
    %v1443 = vmul.f32 %v1415, %v1441
    %v1444 = vmul.f32 %v1416, %v1442
    %v1447 = vrot.slane %v1443, 7
    %v1448 = vrot.slane %v1444, 7
    %v1451 = vsub.f32 %v78, %v1447
    %v1452 = vsub.f32 %v79, %v1448
    %v1453 = vlaneseq
    %v1454 = vshrl.u32 %v1453, 7
    %v1455 = vsub.s32 0, %v1454
    %v1456 = vrot.slane %v1441, %v1455
    %v1457 = vlaneseq
    %v1458 = vshrl.u32 %v1457, 7
    %v1459 = vsub.s32 0, %v1458
    %v1460 = vrot.slane %v1442, %v1459
    %v1461 = vmul.f32 %v1397, %v1456
    %v1462 = vmul.f32 %v1399, %v1460
    %v1463 = vlaneseq
    %v1464 = vshrl.u32 %v1463, 7
    %v1465 = vsub.s32 1, %v1464
    %v1466 = vrot.slane %v1451, %v1465
    %v1467 = vlaneseq
    %v1468 = vshrl.u32 %v1467, 7
    %v1469 = vsub.s32 1, %v1468
    %v1470 = vrot.slane %v1452, %v1469
    %v1471 = vadd.f32 %v1461, %v1466
    %v1472 = vadd.f32 %v1462, %v1470
    %v1473 = vmax.f32 %v1471, 0.0
    %v1474 = vmax.f32 %v1472, 0.0
    %v1475 = vpack.c.bf16 %v1473, %v1473
    %v1476 = vpack.c.bf16 %v1474, %v1474
    %v1477 = vld [vmem:[%s6] sm:$0xff]
    %v1478 = vld [vmem:[%s6 + $0x8] sm:$0xff]
    %v1479 = vld [vmem:[%s6 + $0x10] sm:$0xff]
    %v1480 = vld [vmem:[%s6 + $0x18] sm:$0xff]
    %v1481 = vld [vmem:[%s6 + $0x20] sm:$0xff]
    %v1482 = vld [vmem:[%s6 + $0x28] sm:$0xff]
    %v1483 = vld [vmem:[%s6 + $0x30] sm:$0xff]
    %v1484 = vld [vmem:[%s6 + $0x38] sm:$0xff]
    %v1485 = vld [vmem:[%s6 + $0x40] sm:$0xff]
    %v1486 = vld [vmem:[%s6 + $0x48] sm:$0xff]
    %v1487 = vld [vmem:[%s6 + $0x50] sm:$0xff]
    %v1488 = vld [vmem:[%s6 + $0x58] sm:$0xff]
    %v1489 = vld [vmem:[%s6 + $0x60] sm:$0xff]
    %v1490 = vld [vmem:[%s6 + $0x68] sm:$0xff]
    %v1491 = vld [vmem:[%s6 + $0x70] sm:$0xff]
    %v1492 = vld [vmem:[%s6 + $0x78] sm:$0xff]
    %v1493 = vld [vmem:[%s6 + $0x80] sm:$0xff]
    %v1494 = vld [vmem:[%s6 + $0x88] sm:$0xff]
    %v1495 = vld [vmem:[%s6 + $0x90] sm:$0xff]
    %v1496 = vld [vmem:[%s6 + $0x98] sm:$0xff]
    %v1497 = vld [vmem:[%s6 + $0xa0] sm:$0xff]
    %v1498 = vld [vmem:[%s6 + $0xa8] sm:$0xff]
    %v1499 = vld [vmem:[%s6 + $0xb0] sm:$0xff]
    %v1500 = vld [vmem:[%s6 + $0xb8] sm:$0xff]
    %v1501 = vld [vmem:[%s6 + $0xc0] sm:$0xff]
    %v1502 = vld [vmem:[%s6 + $0xc8] sm:$0xff]
    %v1503 = vld [vmem:[%s6 + $0xd0] sm:$0xff]
    %v1504 = vld [vmem:[%s6 + $0xd8] sm:$0xff]
    %v1505 = vld [vmem:[%s6 + $0xe0] sm:$0xff]
    %v1506 = vld [vmem:[%s6 + $0xe8] sm:$0xff]
    %v1507 = vld [vmem:[%s6 + $0xf0] sm:$0xff]
    %v1508 = vld [vmem:[%s6 + $0xf8] sm:$0xff]
    %v1541 = vunpack.c.l.b16 %v1477
    %v1542 = vunpack.c.h.b16 %v1477
    %v1543 = vunpack.c.l.b16 %v1478
    %v1544 = vunpack.c.h.b16 %v1478
    %v1545 = vunpack.c.l.b16 %v1479
    %v1546 = vunpack.c.h.b16 %v1479
    %v1547 = vunpack.c.l.b16 %v1480
    %v1548 = vunpack.c.h.b16 %v1480
    %v1549 = vunpack.c.l.b16 %v1481
    %v1550 = vunpack.c.h.b16 %v1481
    %v1551 = vunpack.c.l.b16 %v1482
    %v1552 = vunpack.c.h.b16 %v1482
    %v1553 = vunpack.c.l.b16 %v1483
    %v1554 = vunpack.c.h.b16 %v1483
    %v1555 = vunpack.c.l.b16 %v1484
    %v1556 = vunpack.c.h.b16 %v1484
    %v1557 = vunpack.c.l.b16 %v1485
    %v1558 = vunpack.c.h.b16 %v1485
    %v1559 = vunpack.c.l.b16 %v1486
    %v1560 = vunpack.c.h.b16 %v1486
    %v1561 = vunpack.c.l.b16 %v1487
    %v1562 = vunpack.c.h.b16 %v1487
    %v1563 = vunpack.c.l.b16 %v1488
    %v1564 = vunpack.c.h.b16 %v1488
    %v1565 = vunpack.c.l.b16 %v1489
    %v1566 = vunpack.c.h.b16 %v1489
    %v1567 = vunpack.c.l.b16 %v1490
    %v1568 = vunpack.c.h.b16 %v1490
    %v1569 = vunpack.c.l.b16 %v1491
    %v1570 = vunpack.c.h.b16 %v1491
    %v1571 = vunpack.c.l.b16 %v1492
    %v1572 = vunpack.c.h.b16 %v1492
    %v1573 = vunpack.c.l.b16 %v1493
    %v1574 = vunpack.c.h.b16 %v1493
    %v1575 = vunpack.c.l.b16 %v1494
    %v1576 = vunpack.c.h.b16 %v1494
    %v1577 = vunpack.c.l.b16 %v1495
    %v1578 = vunpack.c.h.b16 %v1495
    %v1579 = vunpack.c.l.b16 %v1496
    %v1580 = vunpack.c.h.b16 %v1496
    %v1581 = vunpack.c.l.b16 %v1497
    %v1582 = vunpack.c.h.b16 %v1497
    %v1583 = vunpack.c.l.b16 %v1498
    %v1584 = vunpack.c.h.b16 %v1498
    %v1585 = vunpack.c.l.b16 %v1499
    %v1586 = vunpack.c.h.b16 %v1499
    %v1587 = vunpack.c.l.b16 %v1500
    %v1588 = vunpack.c.h.b16 %v1500
    %v1589 = vunpack.c.l.b16 %v1501
    %v1590 = vunpack.c.h.b16 %v1501
    %v1591 = vunpack.c.l.b16 %v1502
    %v1592 = vunpack.c.h.b16 %v1502
    %v1593 = vunpack.c.l.b16 %v1503
    %v1594 = vunpack.c.h.b16 %v1503
    %v1595 = vunpack.c.l.b16 %v1504
    %v1596 = vunpack.c.h.b16 %v1504
    %v1597 = vunpack.c.l.b16 %v1505
    %v1598 = vunpack.c.h.b16 %v1505
    %v1599 = vunpack.c.l.b16 %v1506
    %v1600 = vunpack.c.h.b16 %v1506
    %v1601 = vunpack.c.l.b16 %v1507
    %v1602 = vunpack.c.h.b16 %v1507
    %v1603 = vunpack.c.l.b16 %v1508
    %v1604 = vunpack.c.h.b16 %v1508
    %v1605 = vpack.c.b16 %v1543, %v1541
    %v1606 = vpack.c.b16 %v1544, %v1542
    %v1607 = vpack.c.b16 %v1547, %v1545
    %v1608 = vpack.c.b16 %v1548, %v1546
    %v1609 = vpack.c.b16 %v1551, %v1549
    %v1610 = vpack.c.b16 %v1552, %v1550
    %v1611 = vpack.c.b16 %v1555, %v1553
    %v1612 = vpack.c.b16 %v1556, %v1554
    %v1613 = vpack.c.b16 %v1559, %v1557
    %v1614 = vpack.c.b16 %v1560, %v1558
    %v1615 = vpack.c.b16 %v1563, %v1561
    %v1616 = vpack.c.b16 %v1564, %v1562
    %v1617 = vpack.c.b16 %v1567, %v1565
    %v1618 = vpack.c.b16 %v1568, %v1566
    %v1619 = vpack.c.b16 %v1571, %v1569
    %v1620 = vpack.c.b16 %v1572, %v1570
    %v1621 = vpack.c.b16 %v1575, %v1573
    %v1622 = vpack.c.b16 %v1576, %v1574
    %v1623 = vpack.c.b16 %v1579, %v1577
    %v1624 = vpack.c.b16 %v1580, %v1578
    %v1625 = vpack.c.b16 %v1583, %v1581
    %v1626 = vpack.c.b16 %v1584, %v1582
    %v1627 = vpack.c.b16 %v1587, %v1585
    %v1628 = vpack.c.b16 %v1588, %v1586
    %v1629 = vpack.c.b16 %v1591, %v1589
    %v1630 = vpack.c.b16 %v1592, %v1590
    %v1631 = vpack.c.b16 %v1595, %v1593
    %v1632 = vpack.c.b16 %v1596, %v1594
    %v1633 = vpack.c.b16 %v1599, %v1597
    %v1634 = vpack.c.b16 %v1600, %v1598
    %v1635 = vpack.c.b16 %v1603, %v1601
    %v1636 = vpack.c.b16 %v1604, %v1602
    %1669 = vmatprep.subr.bf16.mxu0 %v1606
    %1670 = vmatpush1.bf16.msra.mxu0 %v1605
    %1671 = vmatprep.subr.bf16.mxu0 %v1608
    %1672 = vmatpush1.bf16.msra.mxu0 %v1607
    %1673 = vmatprep.subr.bf16.mxu0 %v1610
    %1674 = vmatpush1.bf16.msra.mxu0 %v1609
    %1675 = vmatprep.subr.bf16.mxu0 %v1612
    %1676 = vmatpush1.bf16.msra.mxu0 %v1611
    %1677 = vmatprep.subr.bf16.mxu0 %v1614
    %1678 = vmatpush1.bf16.msra.mxu0 %v1613
    %1679 = vmatprep.subr.bf16.mxu0 %v1616
    %1680 = vmatpush1.bf16.msra.mxu0 %v1615
    %1681 = vmatprep.subr.bf16.mxu0 %v1618
    %1682 = vmatpush1.bf16.msra.mxu0 %v1617
    %1683 = vmatprep.subr.bf16.mxu0 %v1620
    %1684 = vmatpush1.bf16.msra.mxu0 %v1619
    %1685 = vmatprep.subr.bf16.mxu0 %v1622
    %1686 = vmatpush1.bf16.msra.mxu0 %v1621
    %1687 = vmatprep.subr.bf16.mxu0 %v1624
    %1688 = vmatpush1.bf16.msra.mxu0 %v1623
    %1689 = vmatprep.subr.bf16.mxu0 %v1626
    %1690 = vmatpush1.bf16.msra.mxu0 %v1625
    %1691 = vmatprep.subr.bf16.mxu0 %v1628
    %1692 = vmatpush1.bf16.msra.mxu0 %v1627
    %1693 = vmatprep.subr.bf16.mxu0 %v1630
    %1694 = vmatpush1.bf16.msra.mxu0 %v1629
    %1695 = vmatprep.subr.bf16.mxu0 %v1632
    %1696 = vmatpush1.bf16.msra.mxu0 %v1631
    %1697 = vmatprep.subr.bf16.mxu0 %v1634
    %1698 = vmatpush1.bf16.msra.mxu0 %v1633
    %1699 = vmatprep.subr.bf16.mxu0 %v1636
    %1700 = vmatpush1.bf16.msra.mxu0 %v1635
    %1701 = vmatprep.mubr.bf16.mxu0 %v1476
    %1702 = vmatmul.mubr.bf16.gmra.mrb[0].mxu0 %v1475
    %v1703 = vpop.f32.mrb[0].mxu0
    %v1704 = vadd.f32 0.0, %v1703
    %v1705 = vpop.f32.mrb[0].mxu0
    %v1706 = vadd.f32 0.0, %v1705
    %v1707 = vpop.f32.mrb[0].mxu0
    %v1708 = vpop.f32.mrb[0].mxu0
    %1709 = vdwg.mxu0
    %v1710 = vrot.slane %v1704, 4
    %v1711 = vadd.f32 %v1704, %v1710
    %v1712 = vrot.slane %v1711, 2
    %v1713 = vadd.f32 %v1711, %v1712
    %v1714 = vrot.slane %v1713, 1
    %v1715 = vadd.f32 %v1713, %v1714
    %v1716 = vrot.slane %v1706, 4
    %v1717 = vadd.f32 %v1706, %v1716
    %v1718 = vrot.slane %v1717, 2
    %v1719 = vadd.f32 %v1717, %v1718
    %v1720 = vrot.slane %v1719, 1
    %v1721 = vadd.f32 %v1719, %v1720
    %v1722 = vmul.f32 %v1715, %v716
    %v1723 = vmul.f32 %v1721, %v716
    %v1724 = vmul.f32 %v1704, %v1704
    %v1725 = vmul.f32 %v1706, %v1706
    %v1726 = vrot.slane %v1724, 4
    %v1727 = vadd.f32 %v1724, %v1726
    %v1728 = vrot.slane %v1727, 2
    %v1729 = vadd.f32 %v1727, %v1728
    %v1730 = vrot.slane %v1729, 1
    %v1731 = vadd.f32 %v1729, %v1730
    %v1732 = vrot.slane %v1725, 4
    %v1733 = vadd.f32 %v1725, %v1732
    %v1734 = vrot.slane %v1733, 2
    %v1735 = vadd.f32 %v1733, %v1734
    %v1736 = vrot.slane %v1735, 1
    %v1737 = vadd.f32 %v1735, %v1736
    %v1738 = vmul.f32 %v1731, %v716
    %v1739 = vmul.f32 %v1737, %v716
    %v1740 = vmul.f32 %v1722, %v1722
    %v1741 = vmul.f32 %v1723, %v1723
    %v1742 = vsub.f32 %v1738, %v1740
    %v1743 = vsub.f32 %v1739, %v1741
    %v1744 = vadd.f32 %v1742, 1e-05
    %v1745 = vadd.f32 %v1743, 1e-05
    %v1746 = vrsqrt.pop %v1744
    %v1747 = vrsqrt.pop %v1745
    %v1748 = vmul.f32 %v78, %v1746
    %v1749 = vmul.f32 %v79, %v1747
    %v1750 = vmul.f32 %v1722, %v1748
    %v1751 = vmul.f32 %v1723, %v1749
    %v1754 = vrot.slane %v1750, 7
    %v1755 = vrot.slane %v1751, 7
    %v1758 = vsub.f32 %v78, %v1754
    %v1759 = vsub.f32 %v79, %v1755
    %v1760 = vlaneseq
    %v1761 = vshrl.u32 %v1760, 7
    %v1762 = vsub.s32 2, %v1761
    %v1763 = vrot.slane %v1748, %v1762
    %v1764 = vlaneseq
    %v1765 = vshrl.u32 %v1764, 7
    %v1766 = vsub.s32 2, %v1765
    %v1767 = vrot.slane %v1749, %v1766
    %v1768 = vmul.f32 %v1704, %v1763
    %v1769 = vmul.f32 %v1706, %v1767
    %v1770 = vlaneseq
    %v1771 = vshrl.u32 %v1770, 7
    %v1772 = vsub.s32 3, %v1771
    %v1773 = vrot.slane %v1758, %v1772
    %v1774 = vlaneseq
    %v1775 = vshrl.u32 %v1774, 7
    %v1776 = vsub.s32 3, %v1775
    %v1777 = vrot.slane %v1759, %v1776
    %v1778 = vadd.f32 %v1768, %v1773
    %v1779 = vadd.f32 %v1769, %v1777
    %v1780 = vmax.f32 %v1778, 0.0
    %v1781 = vmax.f32 %v1779, 0.0
    %v1782 = vpack.c.bf16 %v1780, %v1780
    %v1783 = vpack.c.bf16 %v1781, %v1781
    %v1784 = vld [vmem:[%s7] sm:$0xff]
    %v1785 = vld [vmem:[%s7 + $0x8] sm:$0xff]
    %v1786 = vld [vmem:[%s7 + $0x10] sm:$0xf]
    %v1787 = vld [vmem:[%s7 + $0x14] sm:$0xff]
    %v1788 = vld [vmem:[%s7 + $0x1c] sm:$0xff]
    %v1789 = vld [vmem:[%s7 + $0x24] sm:$0xf]
    %v1790 = vld [vmem:[%s7 + $0x28] sm:$0xff]
    %v1791 = vld [vmem:[%s7 + $0x30] sm:$0xff]
    %v1792 = vld [vmem:[%s7 + $0x38] sm:$0xf]
    %v1793 = vld [vmem:[%s7 + $0x3c] sm:$0xff]
    %v1794 = vld [vmem:[%s7 + $0x44] sm:$0xff]
    %v1795 = vld [vmem:[%s7 + $0x4c] sm:$0xf]
    %v1796 = vld [vmem:[%s7 + $0x50] sm:$0xff]
    %v1797 = vld [vmem:[%s7 + $0x58] sm:$0xff]
    %v1798 = vld [vmem:[%s7 + $0x60] sm:$0xf]
    %v1799 = vld [vmem:[%s7 + $0x64] sm:$0xff]
    %v1800 = vld [vmem:[%s7 + $0x6c] sm:$0xff]
    %v1801 = vld [vmem:[%s7 + $0x74] sm:$0xf]
    %v1802 = vld [vmem:[%s7 + $0x78] sm:$0xff]
    %v1803 = vld [vmem:[%s7 + $0x80] sm:$0xff]
    %v1804 = vld [vmem:[%s7 + $0x88] sm:$0xf]
    %v1805 = vld [vmem:[%s7 + $0x8c] sm:$0xff]
    %v1806 = vld [vmem:[%s7 + $0x94] sm:$0xff]
    %v1807 = vld [vmem:[%s7 + $0x9c] sm:$0xf]
    %v1808 = vld [vmem:[%s7 + $0xa0] sm:$0xff]
    %v1809 = vld [vmem:[%s7 + $0xa8] sm:$0xff]
    %v1810 = vld [vmem:[%s7 + $0xb0] sm:$0xf]
    %v1811 = vld [vmem:[%s7 + $0xb4] sm:$0xff]
    %v1812 = vld [vmem:[%s7 + $0xbc] sm:$0xff]
    %v1813 = vld [vmem:[%s7 + $0xc4] sm:$0xf]
    %v1814 = vld [vmem:[%s7 + $0xc8] sm:$0xff]
    %v1815 = vld [vmem:[%s7 + $0xd0] sm:$0xff]
    %v1816 = vld [vmem:[%s7 + $0xd8] sm:$0xf]
    %v1817 = vld [vmem:[%s7 + $0xdc] sm:$0xff]
    %v1818 = vld [vmem:[%s7 + $0xe4] sm:$0xff]
    %v1819 = vld [vmem:[%s7 + $0xec] sm:$0xf]
    %v1820 = vld [vmem:[%s7 + $0xf0] sm:$0xff]
    %v1821 = vld [vmem:[%s7 + $0xf8] sm:$0xff]
    %v1822 = vld [vmem:[%s7 + $0x100] sm:$0xf]
    %v1823 = vld [vmem:[%s7 + $0x104] sm:$0xff]
    %v1824 = vld [vmem:[%s7 + $0x10c] sm:$0xff]
    %v1825 = vld [vmem:[%s7 + $0x114] sm:$0xf]
    %v1826 = vld [vmem:[%s7 + $0x118] sm:$0xff]
    %v1827 = vld [vmem:[%s7 + $0x120] sm:$0xff]
    %v1828 = vld [vmem:[%s7 + $0x128] sm:$0xf]
    %v1829 = vld [vmem:[%s7 + $0x12c] sm:$0xff]
    %v1830 = vld [vmem:[%s7 + $0x134] sm:$0xff]
    %v1831 = vld [vmem:[%s7 + $0x13c] sm:$0xf]
    %v1832 = vld [vmem:[%s7 + $0x140] sm:$0xff]
    %v1833 = vld [vmem:[%s7 + $0x148] sm:$0xff]
    %v1834 = vld [vmem:[%s7 + $0x150] sm:$0xf]
    %v1835 = vld [vmem:[%s7 + $0x154] sm:$0xff]
    %v1836 = vld [vmem:[%s7 + $0x15c] sm:$0xff]
    %v1837 = vld [vmem:[%s7 + $0x164] sm:$0xf]
    %v1838 = vld [vmem:[%s7 + $0x168] sm:$0xff]
    %v1839 = vld [vmem:[%s7 + $0x170] sm:$0xff]
    %v1840 = vld [vmem:[%s7 + $0x178] sm:$0xf]
    %v1841 = vld [vmem:[%s7 + $0x17c] sm:$0xff]
    %v1842 = vld [vmem:[%s7 + $0x184] sm:$0xff]
    %v1843 = vld [vmem:[%s7 + $0x18c] sm:$0xf]
    %v1844 = vld [vmem:[%s7 + $0x190] sm:$0xff]
    %v1845 = vld [vmem:[%s7 + $0x198] sm:$0xff]
    %v1846 = vld [vmem:[%s7 + $0x1a0] sm:$0xf]
    %v1847 = vld [vmem:[%s7 + $0x1a4] sm:$0xff]
    %v1848 = vld [vmem:[%s7 + $0x1ac] sm:$0xff]
    %v1849 = vld [vmem:[%s7 + $0x1b4] sm:$0xf]
    %v1850 = vld [vmem:[%s7 + $0x1b8] sm:$0xff]
    %v1851 = vld [vmem:[%s7 + $0x1c0] sm:$0xff]
    %v1852 = vld [vmem:[%s7 + $0x1c8] sm:$0xf]
    %v1853 = vld [vmem:[%s7 + $0x1cc] sm:$0xff]
    %v1854 = vld [vmem:[%s7 + $0x1d4] sm:$0xff]
    %v1855 = vld [vmem:[%s7 + $0x1dc] sm:$0xf]
    %v1856 = vld [vmem:[%s7 + $0x1e0] sm:$0xff]
    %v1857 = vld [vmem:[%s7 + $0x1e8] sm:$0xff]
    %v1858 = vld [vmem:[%s7 + $0x1f0] sm:$0xf]
    %v1859 = vld [vmem:[%s7 + $0x1f4] sm:$0xff]
    %v1860 = vld [vmem:[%s7 + $0x1fc] sm:$0xff]
    %v1861 = vld [vmem:[%s7 + $0x204] sm:$0xf]
    %v1862 = vld [vmem:[%s7 + $0x208] sm:$0xff]
    %v1863 = vld [vmem:[%s7 + $0x210] sm:$0xff]
    %v1864 = vld [vmem:[%s7 + $0x218] sm:$0xf]
    %v1865 = vld [vmem:[%s7 + $0x21c] sm:$0xff]
    %v1866 = vld [vmem:[%s7 + $0x224] sm:$0xff]
    %v1867 = vld [vmem:[%s7 + $0x22c] sm:$0xf]
    %v1868 = vld [vmem:[%s7 + $0x230] sm:$0xff]
    %v1869 = vld [vmem:[%s7 + $0x238] sm:$0xff]
    %v1870 = vld [vmem:[%s7 + $0x240] sm:$0xf]
    %v1871 = vld [vmem:[%s7 + $0x244] sm:$0xff]
    %v1872 = vld [vmem:[%s7 + $0x24c] sm:$0xff]
    %v1873 = vld [vmem:[%s7 + $0x254] sm:$0xf]
    %v1874 = vld [vmem:[%s7 + $0x258] sm:$0xff]
    %v1875 = vld [vmem:[%s7 + $0x260] sm:$0xff]
    %v1876 = vld [vmem:[%s7 + $0x268] sm:$0xf]
    %v1877 = vld [vmem:[%s7 + $0x26c] sm:$0xff]
    %v1878 = vld [vmem:[%s7 + $0x274] sm:$0xff]
    %v1879 = vld [vmem:[%s7 + $0x27c] sm:$0xf]
    %v1880 = vld [vmem:[%s9] sm:$0x1f]
    %v1882 = vlaneseq
    %v1883 = vshrl.u32 %v1882, 7
    %v1884 = vsub.s32 0, %v1883
    %v1885 = vrot.slane %v1880, %v1884
    %v1886 = vlaneseq
    %v1887 = vshrl.u32 %v1886, 7
    %v1888 = vsub.s32 1, %v1887
    %v1889 = vrot.slane %v1880, %v1888
    %v1890 = vlaneseq
    %v1891 = vshrl.u32 %v1890, 7
    %v1892 = vsub.s32 2, %v1891
    %v1893 = vrot.slane %v1880, %v1892
    %v1894 = vlaneseq
    %v1895 = vshrl.u32 %v1894, 7
    %v1896 = vsub.s32 3, %v1895
    %v1897 = vrot.slane %v1880, %v1896
    %v1898 = vlaneseq
    %v1899 = vshrl.u32 %v1898, 7
    %v1900 = vsub.s32 4, %v1899
    %v1901 = vrot.slane %v1880, %v1900
    %v2003 = vunpack.c.l.b16 %v1784
    %v2004 = vunpack.c.h.b16 %v1784
    %v2005 = vunpack.c.l.b16 %v1785
    %v2006 = vunpack.c.h.b16 %v1785
    %v2007 = vunpack.c.l.b16 %v1786
    %v2008 = vunpack.c.l.b16 %v1787
    %v2009 = vunpack.c.h.b16 %v1787
    %v2010 = vunpack.c.l.b16 %v1788
    %v2011 = vunpack.c.h.b16 %v1788
    %v2012 = vunpack.c.l.b16 %v1789
    %v2013 = vunpack.c.l.b16 %v1790
    %v2014 = vunpack.c.h.b16 %v1790
    %v2015 = vunpack.c.l.b16 %v1791
    %v2016 = vunpack.c.h.b16 %v1791
    %v2017 = vunpack.c.l.b16 %v1792
    %v2018 = vunpack.c.l.b16 %v1793
    %v2019 = vunpack.c.h.b16 %v1793
    %v2020 = vunpack.c.l.b16 %v1794
    %v2021 = vunpack.c.h.b16 %v1794
    %v2022 = vunpack.c.l.b16 %v1795
    %v2023 = vunpack.c.l.b16 %v1796
    %v2024 = vunpack.c.h.b16 %v1796
    %v2025 = vunpack.c.l.b16 %v1797
    %v2026 = vunpack.c.h.b16 %v1797
    %v2027 = vunpack.c.l.b16 %v1798
    %v2028 = vunpack.c.l.b16 %v1799
    %v2029 = vunpack.c.h.b16 %v1799
    %v2030 = vunpack.c.l.b16 %v1800
    %v2031 = vunpack.c.h.b16 %v1800
    %v2032 = vunpack.c.l.b16 %v1801
    %v2033 = vunpack.c.l.b16 %v1802
    %v2034 = vunpack.c.h.b16 %v1802
    %v2035 = vunpack.c.l.b16 %v1803
    %v2036 = vunpack.c.h.b16 %v1803
    %v2037 = vunpack.c.l.b16 %v1804
    %v2038 = vunpack.c.l.b16 %v1805
    %v2039 = vunpack.c.h.b16 %v1805
    %v2040 = vunpack.c.l.b16 %v1806
    %v2041 = vunpack.c.h.b16 %v1806
    %v2042 = vunpack.c.l.b16 %v1807
    %v2043 = vunpack.c.l.b16 %v1808
    %v2044 = vunpack.c.h.b16 %v1808
    %v2045 = vunpack.c.l.b16 %v1809
    %v2046 = vunpack.c.h.b16 %v1809
    %v2047 = vunpack.c.l.b16 %v1810
    %v2048 = vunpack.c.l.b16 %v1811
    %v2049 = vunpack.c.h.b16 %v1811
    %v2050 = vunpack.c.l.b16 %v1812
    %v2051 = vunpack.c.h.b16 %v1812
    %v2052 = vunpack.c.l.b16 %v1813
    %v2053 = vunpack.c.l.b16 %v1814
    %v2054 = vunpack.c.h.b16 %v1814
    %v2055 = vunpack.c.l.b16 %v1815
    %v2056 = vunpack.c.h.b16 %v1815
    %v2057 = vunpack.c.l.b16 %v1816
    %v2058 = vunpack.c.l.b16 %v1817
    %v2059 = vunpack.c.h.b16 %v1817
    %v2060 = vunpack.c.l.b16 %v1818
    %v2061 = vunpack.c.h.b16 %v1818
    %v2062 = vunpack.c.l.b16 %v1819
    %v2063 = vunpack.c.l.b16 %v1820
    %v2064 = vunpack.c.h.b16 %v1820
    %v2065 = vunpack.c.l.b16 %v1821
    %v2066 = vunpack.c.h.b16 %v1821
    %v2067 = vunpack.c.l.b16 %v1822
    %v2068 = vunpack.c.l.b16 %v1823
    %v2069 = vunpack.c.h.b16 %v1823
    %v2070 = vunpack.c.l.b16 %v1824
    %v2071 = vunpack.c.h.b16 %v1824
    %v2072 = vunpack.c.l.b16 %v1825
    %v2073 = vunpack.c.l.b16 %v1826
    %v2074 = vunpack.c.h.b16 %v1826
    %v2075 = vunpack.c.l.b16 %v1827
    %v2076 = vunpack.c.h.b16 %v1827
    %v2077 = vunpack.c.l.b16 %v1828
    %v2078 = vunpack.c.l.b16 %v1829
    %v2079 = vunpack.c.h.b16 %v1829
    %v2080 = vunpack.c.l.b16 %v1830
    %v2081 = vunpack.c.h.b16 %v1830
    %v2082 = vunpack.c.l.b16 %v1831
    %v2083 = vunpack.c.l.b16 %v1832
    %v2084 = vunpack.c.h.b16 %v1832
    %v2085 = vunpack.c.l.b16 %v1833
    %v2086 = vunpack.c.h.b16 %v1833
    %v2087 = vunpack.c.l.b16 %v1834
    %v2088 = vunpack.c.l.b16 %v1835
    %v2089 = vunpack.c.h.b16 %v1835
    %v2090 = vunpack.c.l.b16 %v1836
    %v2091 = vunpack.c.h.b16 %v1836
    %v2092 = vunpack.c.l.b16 %v1837
    %v2093 = vunpack.c.l.b16 %v1838
    %v2094 = vunpack.c.h.b16 %v1838
    %v2095 = vunpack.c.l.b16 %v1839
    %v2096 = vunpack.c.h.b16 %v1839
    %v2097 = vunpack.c.l.b16 %v1840
    %v2098 = vunpack.c.l.b16 %v1841
    %v2099 = vunpack.c.h.b16 %v1841
    %v2100 = vunpack.c.l.b16 %v1842
    %v2101 = vunpack.c.h.b16 %v1842
    %v2102 = vunpack.c.l.b16 %v1843
    %v2103 = vunpack.c.l.b16 %v1844
    %v2104 = vunpack.c.h.b16 %v1844
    %v2105 = vunpack.c.l.b16 %v1845
    %v2106 = vunpack.c.h.b16 %v1845
    %v2107 = vunpack.c.l.b16 %v1846
    %v2108 = vunpack.c.l.b16 %v1847
    %v2109 = vunpack.c.h.b16 %v1847
    %v2110 = vunpack.c.l.b16 %v1848
    %v2111 = vunpack.c.h.b16 %v1848
    %v2112 = vunpack.c.l.b16 %v1849
    %v2113 = vunpack.c.l.b16 %v1850
    %v2114 = vunpack.c.h.b16 %v1850
    %v2115 = vunpack.c.l.b16 %v1851
    %v2116 = vunpack.c.h.b16 %v1851
    %v2117 = vunpack.c.l.b16 %v1852
    %v2118 = vunpack.c.l.b16 %v1853
    %v2119 = vunpack.c.h.b16 %v1853
    %v2120 = vunpack.c.l.b16 %v1854
    %v2121 = vunpack.c.h.b16 %v1854
    %v2122 = vunpack.c.l.b16 %v1855
    %v2123 = vunpack.c.l.b16 %v1856
    %v2124 = vunpack.c.h.b16 %v1856
    %v2125 = vunpack.c.l.b16 %v1857
    %v2126 = vunpack.c.h.b16 %v1857
    %v2127 = vunpack.c.l.b16 %v1858
    %v2128 = vunpack.c.l.b16 %v1859
    %v2129 = vunpack.c.h.b16 %v1859
    %v2130 = vunpack.c.l.b16 %v1860
    %v2131 = vunpack.c.h.b16 %v1860
    %v2132 = vunpack.c.l.b16 %v1861
    %v2133 = vunpack.c.l.b16 %v1862
    %v2134 = vunpack.c.h.b16 %v1862
    %v2135 = vunpack.c.l.b16 %v1863
    %v2136 = vunpack.c.h.b16 %v1863
    %v2137 = vunpack.c.l.b16 %v1864
    %v2138 = vunpack.c.l.b16 %v1865
    %v2139 = vunpack.c.h.b16 %v1865
    %v2140 = vunpack.c.l.b16 %v1866
    %v2141 = vunpack.c.h.b16 %v1866
    %v2142 = vunpack.c.l.b16 %v1867
    %v2143 = vunpack.c.l.b16 %v1868
    %v2144 = vunpack.c.h.b16 %v1868
    %v2145 = vunpack.c.l.b16 %v1869
    %v2146 = vunpack.c.h.b16 %v1869
    %v2147 = vunpack.c.l.b16 %v1870
    %v2148 = vunpack.c.l.b16 %v1871
    %v2149 = vunpack.c.h.b16 %v1871
    %v2150 = vunpack.c.l.b16 %v1872
    %v2151 = vunpack.c.h.b16 %v1872
    %v2152 = vunpack.c.l.b16 %v1873
    %v2153 = vunpack.c.l.b16 %v1874
    %v2154 = vunpack.c.h.b16 %v1874
    %v2155 = vunpack.c.l.b16 %v1875
    %v2156 = vunpack.c.h.b16 %v1875
    %v2157 = vunpack.c.l.b16 %v1876
    %v2158 = vunpack.c.l.b16 %v1877
    %v2159 = vunpack.c.h.b16 %v1877
    %v2160 = vunpack.c.l.b16 %v1878
    %v2161 = vunpack.c.h.b16 %v1878
    %v2162 = vunpack.c.l.b16 %v1879
    %v2163 = vpack.c.b16 %v2008, %v2003
    %v2164 = vpack.c.b16 %v2009, %v2004
    %v2165 = vpack.c.b16 %v2010, %v2005
    %v2166 = vpack.c.b16 %v2011, %v2006
    %v2167 = vpack.c.b16 %v2012, %v2007
    %v2168 = vpack.c.b16 %v2018, %v2013
    %v2169 = vpack.c.b16 %v2019, %v2014
    %v2170 = vpack.c.b16 %v2020, %v2015
    %v2171 = vpack.c.b16 %v2021, %v2016
    %v2172 = vpack.c.b16 %v2022, %v2017
    %v2173 = vpack.c.b16 %v2028, %v2023
    %v2174 = vpack.c.b16 %v2029, %v2024
    %v2175 = vpack.c.b16 %v2030, %v2025
    %v2176 = vpack.c.b16 %v2031, %v2026
    %v2177 = vpack.c.b16 %v2032, %v2027
    %v2178 = vpack.c.b16 %v2038, %v2033
    %v2179 = vpack.c.b16 %v2039, %v2034
    %v2180 = vpack.c.b16 %v2040, %v2035
    %v2181 = vpack.c.b16 %v2041, %v2036
    %v2182 = vpack.c.b16 %v2042, %v2037
    %v2183 = vpack.c.b16 %v2048, %v2043
    %v2184 = vpack.c.b16 %v2049, %v2044
    %v2185 = vpack.c.b16 %v2050, %v2045
    %v2186 = vpack.c.b16 %v2051, %v2046
    %v2187 = vpack.c.b16 %v2052, %v2047
    %v2188 = vpack.c.b16 %v2058, %v2053
    %v2189 = vpack.c.b16 %v2059, %v2054
    %v2190 = vpack.c.b16 %v2060, %v2055
    %v2191 = vpack.c.b16 %v2061, %v2056
    %v2192 = vpack.c.b16 %v2062, %v2057
    %v2193 = vpack.c.b16 %v2068, %v2063
    %v2194 = vpack.c.b16 %v2069, %v2064
    %v2195 = vpack.c.b16 %v2070, %v2065
    %v2196 = vpack.c.b16 %v2071, %v2066
    %v2197 = vpack.c.b16 %v2072, %v2067
    %v2198 = vpack.c.b16 %v2078, %v2073
    %v2199 = vpack.c.b16 %v2079, %v2074
    %v2200 = vpack.c.b16 %v2080, %v2075
    %v2201 = vpack.c.b16 %v2081, %v2076
    %v2202 = vpack.c.b16 %v2082, %v2077
    %v2203 = vpack.c.b16 %v2088, %v2083
    %v2204 = vpack.c.b16 %v2089, %v2084
    %v2205 = vpack.c.b16 %v2090, %v2085
    %v2206 = vpack.c.b16 %v2091, %v2086
    %v2207 = vpack.c.b16 %v2092, %v2087
    %v2208 = vpack.c.b16 %v2098, %v2093
    %v2209 = vpack.c.b16 %v2099, %v2094
    %v2210 = vpack.c.b16 %v2100, %v2095
    %v2211 = vpack.c.b16 %v2101, %v2096
    %v2212 = vpack.c.b16 %v2102, %v2097
    %v2213 = vpack.c.b16 %v2108, %v2103
    %v2214 = vpack.c.b16 %v2109, %v2104
    %v2215 = vpack.c.b16 %v2110, %v2105
    %v2216 = vpack.c.b16 %v2111, %v2106
    %v2217 = vpack.c.b16 %v2112, %v2107
    %v2218 = vpack.c.b16 %v2118, %v2113
    %v2219 = vpack.c.b16 %v2119, %v2114
    %v2220 = vpack.c.b16 %v2120, %v2115
    %v2221 = vpack.c.b16 %v2121, %v2116
    %v2222 = vpack.c.b16 %v2122, %v2117
    %v2223 = vpack.c.b16 %v2128, %v2123
    %v2224 = vpack.c.b16 %v2129, %v2124
    %v2225 = vpack.c.b16 %v2130, %v2125
    %v2226 = vpack.c.b16 %v2131, %v2126
    %v2227 = vpack.c.b16 %v2132, %v2127
    %v2228 = vpack.c.b16 %v2138, %v2133
    %v2229 = vpack.c.b16 %v2139, %v2134
    %v2230 = vpack.c.b16 %v2140, %v2135
    %v2231 = vpack.c.b16 %v2141, %v2136
    %v2232 = vpack.c.b16 %v2142, %v2137
    %v2233 = vpack.c.b16 %v2148, %v2143
    %v2234 = vpack.c.b16 %v2149, %v2144
    %v2235 = vpack.c.b16 %v2150, %v2145
    %v2236 = vpack.c.b16 %v2151, %v2146
    %v2237 = vpack.c.b16 %v2152, %v2147
    %v2238 = vpack.c.b16 %v2158, %v2153
    %v2239 = vpack.c.b16 %v2159, %v2154
    %v2240 = vpack.c.b16 %v2160, %v2155
    %v2241 = vpack.c.b16 %v2161, %v2156
    %v2242 = vpack.c.b16 %v2162, %v2157
    %2323 = vmatprep.subr.bf16.mxu0 %v2164
    %2324 = vmatpush1.bf16.msra.mxu0 %v2163
    %2325 = vmatprep.subr.bf16.mxu0 %v2169
    %2326 = vmatpush1.bf16.msra.mxu0 %v2168
    %2327 = vmatprep.subr.bf16.mxu0 %v2174
    %2328 = vmatpush1.bf16.msra.mxu0 %v2173
    %2329 = vmatprep.subr.bf16.mxu0 %v2179
    %2330 = vmatpush1.bf16.msra.mxu0 %v2178
    %2331 = vmatprep.subr.bf16.mxu0 %v2184
    %2332 = vmatpush1.bf16.msra.mxu0 %v2183
    %2333 = vmatprep.subr.bf16.mxu0 %v2189
    %2334 = vmatpush1.bf16.msra.mxu0 %v2188
    %2335 = vmatprep.subr.bf16.mxu0 %v2194
    %2336 = vmatpush1.bf16.msra.mxu0 %v2193
    %2337 = vmatprep.subr.bf16.mxu0 %v2199
    %2338 = vmatpush1.bf16.msra.mxu0 %v2198
    %2339 = vmatprep.subr.bf16.mxu0 %v2204
    %2340 = vmatpush1.bf16.msra.mxu0 %v2203
    %2341 = vmatprep.subr.bf16.mxu0 %v2209
    %2342 = vmatpush1.bf16.msra.mxu0 %v2208
    %2343 = vmatprep.subr.bf16.mxu0 %v2214
    %2344 = vmatpush1.bf16.msra.mxu0 %v2213
    %2345 = vmatprep.subr.bf16.mxu0 %v2219
    %2346 = vmatpush1.bf16.msra.mxu0 %v2218
    %2347 = vmatprep.subr.bf16.mxu0 %v2224
    %2348 = vmatpush1.bf16.msra.mxu0 %v2223
    %2349 = vmatprep.subr.bf16.mxu0 %v2229
    %2350 = vmatpush1.bf16.msra.mxu0 %v2228
    %2351 = vmatprep.subr.bf16.mxu0 %v2234
    %2352 = vmatpush1.bf16.msra.mxu0 %v2233
    %2353 = vmatprep.subr.bf16.mxu0 %v2239
    %2354 = vmatpush1.bf16.msra.mxu0 %v2238
    %2355 = vmatprep.mubr.bf16.mxu0 %v1783
    %2356 = vmatmul.mubr.bf16.gmra.mrb[0].mxu0 %v1782
    %v2357 = vpop.f32.mrb[0].mxu0
    %v2358 = vadd.f32 %v1885, %v2357
    %v2359 = vpop.f32.mrb[0].mxu0
    %v2360 = vadd.f32 %v1889, %v2359
    %v2361 = vpop.f32.mrb[0].mxu0
    %v2362 = vpop.f32.mrb[0].mxu0
    %2363 = vdwg.mxu0
    %2364 = vmatprep.subr.bf16.mxu0 %v2166
    %2365 = vmatpush1.bf16.msra.mxu0 %v2165
    %2366 = vmatprep.subr.bf16.mxu0 %v2171
    %2367 = vmatpush1.bf16.msra.mxu0 %v2170
    %2368 = vmatprep.subr.bf16.mxu0 %v2176
    %2369 = vmatpush1.bf16.msra.mxu0 %v2175
    %2370 = vmatprep.subr.bf16.mxu0 %v2181
    %2371 = vmatpush1.bf16.msra.mxu0 %v2180
    %2372 = vmatprep.subr.bf16.mxu0 %v2186
    %2373 = vmatpush1.bf16.msra.mxu0 %v2185
    %2374 = vmatprep.subr.bf16.mxu0 %v2191
    %2375 = vmatpush1.bf16.msra.mxu0 %v2190
    %2376 = vmatprep.subr.bf16.mxu0 %v2196
    %2377 = vmatpush1.bf16.msra.mxu0 %v2195
    %2378 = vmatprep.subr.bf16.mxu0 %v2201
    %2379 = vmatpush1.bf16.msra.mxu0 %v2200
    %2380 = vmatprep.subr.bf16.mxu0 %v2206
    %2381 = vmatpush1.bf16.msra.mxu0 %v2205
    %2382 = vmatprep.subr.bf16.mxu0 %v2211
    %2383 = vmatpush1.bf16.msra.mxu0 %v2210
    %2384 = vmatprep.subr.bf16.mxu0 %v2216
    %2385 = vmatpush1.bf16.msra.mxu0 %v2215
    %2386 = vmatprep.subr.bf16.mxu0 %v2221
    %2387 = vmatpush1.bf16.msra.mxu0 %v2220
    %2388 = vmatprep.subr.bf16.mxu0 %v2226
    %2389 = vmatpush1.bf16.msra.mxu0 %v2225
    %2390 = vmatprep.subr.bf16.mxu0 %v2231
    %2391 = vmatpush1.bf16.msra.mxu0 %v2230
    %2392 = vmatprep.subr.bf16.mxu0 %v2236
    %2393 = vmatpush1.bf16.msra.mxu0 %v2235
    %2394 = vmatprep.subr.bf16.mxu0 %v2241
    %2395 = vmatpush1.bf16.msra.mxu0 %v2240
    %2396 = vmatprep.mubr.bf16.mxu0 %v1783
    %2397 = vmatmul.mubr.bf16.gmra.mrb[0].mxu0 %v1782
    %v2398 = vpop.f32.mrb[0].mxu0
    %v2399 = vadd.f32 %v1893, %v2398
    %v2400 = vpop.f32.mrb[0].mxu0
    %v2401 = vadd.f32 %v1897, %v2400
    %v2402 = vpop.f32.mrb[0].mxu0
    %v2403 = vpop.f32.mrb[0].mxu0
    %2404 = vdwg.mxu0
    %2405 = vmatprep.subr.bf16.mxu0 0
    %2406 = vmatpush1.bf16.msra.mxu0 %v2167
    %2407 = vmatprep.subr.bf16.mxu0 0
    %2408 = vmatpush1.bf16.msra.mxu0 %v2172
    %2409 = vmatprep.subr.bf16.mxu0 0
    %2410 = vmatpush1.bf16.msra.mxu0 %v2177
    %2411 = vmatprep.subr.bf16.mxu0 0
    %2412 = vmatpush1.bf16.msra.mxu0 %v2182
    %2413 = vmatprep.subr.bf16.mxu0 0
    %2414 = vmatpush1.bf16.msra.mxu0 %v2187
    %2415 = vmatprep.subr.bf16.mxu0 0
    %2416 = vmatpush1.bf16.msra.mxu0 %v2192
    %2417 = vmatprep.subr.bf16.mxu0 0
    %2418 = vmatpush1.bf16.msra.mxu0 %v2197
    %2419 = vmatprep.subr.bf16.mxu0 0
    %2420 = vmatpush1.bf16.msra.mxu0 %v2202
    %2421 = vmatprep.subr.bf16.mxu0 0
    %2422 = vmatpush1.bf16.msra.mxu0 %v2207
    %2423 = vmatprep.subr.bf16.mxu0 0
    %2424 = vmatpush1.bf16.msra.mxu0 %v2212
    %2425 = vmatprep.subr.bf16.mxu0 0
    %2426 = vmatpush1.bf16.msra.mxu0 %v2217
    %2427 = vmatprep.subr.bf16.mxu0 0
    %2428 = vmatpush1.bf16.msra.mxu0 %v2222
    %2429 = vmatprep.subr.bf16.mxu0 0
    %2430 = vmatpush1.bf16.msra.mxu0 %v2227
    %2431 = vmatprep.subr.bf16.mxu0 0
    %2432 = vmatpush1.bf16.msra.mxu0 %v2232
    %2433 = vmatprep.subr.bf16.mxu0 0
    %2434 = vmatpush1.bf16.msra.mxu0 %v2237
    %2435 = vmatprep.subr.bf16.mxu0 0
    %2436 = vmatpush1.bf16.msra.mxu0 %v2242
    %2437 = vmatprep.mubr.bf16.mxu0 %v1783
    %2438 = vmatmul.mubr.bf16.gmra.mrb[0].mxu0 %v1782
    %v2439 = vpop.f32.mrb[0].mxu0
    %v2440 = vadd.f32 %v1901, %v2439
    %v2441 = vpop.f32.mrb[0].mxu0
    %v2442 = vpop.f32.mrb[0].mxu0
    %v2443 = vpop.f32.mrb[0].mxu0
    %2444 = vdwg.mxu0
    %2445 = vst [vmem:[#allocation8] sm:$0xff] %v2358
    %2446 = vst [vmem:[#allocation8 + $0x8] sm:$0xff] %v2360
    %2447 = vst [vmem:[#allocation8 + $0x10] sm:$0xff] %v2399
    %2448 = vst [vmem:[#allocation8 + $0x18] sm:$0xff] %v2401
    %vm2449 = vcmask 195584
    %2450 = vst.msk [vmem:[#allocation8 + $0x20] sm:$0xff] %vm2449, %v2440
    // Predicated region
    $region54: #{tpu_custom_call.1} parent=1 // pred_check
      _
    $region55: #{tpu_custom_call.1} parent=1 // pred_check_branch
      %2452 = sbr.rel (0) target = $region57
    $region56: #{tpu_custom_call.1} parent=1 // pred_region
      %s2454 = ssub.s32 640, 640
      %2455 = vsyncadd [#allocation4], %s2454
      %s2457 = sshll.u32 [#allocation8], 4
      %s2458 = int_to_ptr.vmem [resolvable:$true] %s2457
      %2460 = dma.vmem_to_hbm [thread:$0]  %s2458, 640, %s10, [#allocation4]
    $region57: #{tpu_custom_call.1} parent=1 // pred_fallthru
      _
    // Predicated region
    $region58: #{tpu_custom_call.1} parent=1 // pred_check
      _
    $region59: #{tpu_custom_call.1} parent=1 // pred_check_branch
      %2462 = sbr.rel (0) target = $region61
    $region60: #{tpu_custom_call.1} parent=1 // pred_region
      %2463 = dma.done [#allocation4], 640
    $region61: #{tpu_custom_call.1} parent=1 // pred_fallthru
      _
    %2464 = vsyncpa [#allocation3], 1
    %2465 = vsyncpa [#allocation6], 1
    %2466 = vsyncpa [#allocation4], 1

</llo_original>
